<compile_context>
chip_gen: v7x
topology: tpu7x:2x2x1
jax: 0.10.0
libtpu: 0.0.40
codegen_flags: <defaults>
</compile_context>

<pallas_src>
from functools import partial

import jax
import jax.numpy as jnp
from jax.experimental import pallas as pl
from jax.experimental.pallas import tpu as pltpu


# ---------------------------------------------------------------------------
# Kernel
# ---------------------------------------------------------------------------
def _fakequant_lora_kernel(x_ref, w_ref, la_ref, lb_ref, *rest, scaling, nbits,
                           k_chunk, n_chunks, has_bias):
    if has_bias:
        bias_ref, o_ref, w_est_ref = rest
    else:
        bias_ref = None
        o_ref, w_est_ref = rest

    # ---- merged + fake-quantized weight tile: computed once per out-tile ----
    @pl.when(pl.program_id(1) == 0)
    def _():
        max_v = float(2 ** nbits - 1)
        lb = lb_ref[...].astype(jnp.float32)                 # [r, TN]

        def merged_chunk(c):
            lo = c * k_chunk                                 # static python ints
            hi = lo + k_chunk
            w = w_ref[:, lo:hi].astype(jnp.float32)          # [TN, kc]
            la_c = la_ref[:, lo:hi].astype(jnp.float32)      # [r, kc]
            # LoRA delta chunk: delta[n, k] = sum_r lora_B[r, n] * lora_A[k, r]
            delta = jax.lax.dot_general(
                lb, la_c, dimension_numbers=(((0,), (0,)), ((), ())),
                preferred_element_type=jnp.float32)          # [TN, kc]
            return w + scaling * delta

        # Pass 1: streaming per-output-channel min / max over K chunks, so
        # only one [TN, kc] f32 temporary is live at a time.
        w_min = None
        w_max = None
        for c in range(n_chunks):
            wc = merged_chunk(c)
            c_min = jnp.min(wc, axis=-1, keepdims=True)      # [TN, 1]
            c_max = jnp.max(wc, axis=-1, keepdims=True)
            w_min = c_min if w_min is None else jnp.minimum(w_min, c_min)
            w_max = c_max if w_max is None else jnp.maximum(w_max, c_max)

        # HQQ asymmetric fake quant (quant_param: nbits, group_size=in_features,
        # axis=1, optimize=False, round_zero=False, bitpack=False).
        # TODO(synk): HQQ's optional optimize=True Lp-shrinkage refinement of
        # scale/zero and arbitrary group_size are not implemented.
        scale = jnp.minimum(max_v / (w_max - w_min), 2e4)    # [TN, 1], HQQ clamp
        zero = -w_min * scale
        inv_scale = 1.0 / scale                              # per-row reciprocal

        # Pass 2: per-chunk round/clip/dequant written straight into the
        # weight-estimate scratch (stored in the matmul compute dtype).
        for c in range(n_chunks):
            lo = c * k_chunk
            hi = lo + k_chunk
            wc = merged_chunk(c)
            w_q = jnp.clip(jnp.round(wc * scale + zero), 0.0, max_v)
            w_est_ref[:, lo:hi] = ((w_q - zero) * inv_scale).astype(
                w_est_ref.dtype)

    # ---- out[m, n] = x[m, k] . w_est[n, k] (NT contraction over in_features)
    out = jax.lax.dot_general(
        x_ref[...], w_est_ref[...],
        dimension_numbers=(((1,), (1,)), ((), ())),
        preferred_element_type=jnp.float32)
    if has_bias:
        out = out + bias_ref[...].astype(jnp.float32)
    o_ref[...] = out.astype(o_ref.dtype)


# ---------------------------------------------------------------------------
# Tiling / VMEM helpers
# ---------------------------------------------------------------------------
def _round_up(v, mult):
    return -(-v // mult) * mult


def _pick_chunk(in_f, max_chunk=512):
    """Largest 128-multiple divisor of in_f that is <= max_chunk (else in_f)."""
    if in_f <= max_chunk:
        return in_f
    c = (max_chunk // 128) * 128
    while c >= 128:
        if in_f % c == 0:
            return c
        c -= 128
    return in_f


def _vmem_capacity_bytes():
    try:
        return int(pltpu.get_tpu_info().vmem_capacity_bytes)
    except Exception:                        # unknown chip / query unavailable
        return 64 * 1024 * 1024              # conservative: v7x per-core VMEM


def _vmem_estimate(tm, tn, in_f, r, kc, x_bytes, w_bytes, est_bytes,
                   lora_bytes, out_bytes, w_bufs, has_bias):
    """Rough per-step VMEM footprint of the double-buffered pipeline."""
    r8 = max(8, _round_up(r, 8))
    total = 2 * tm * in_f * x_bytes                  # x tile
    total += w_bufs * tn * in_f * w_bytes            # base weight tile
    total += 2 * r8 * in_f * lora_bytes              # lora_A^T (whole)
    total += 2 * r8 * tn * lora_bytes                # lora_B tile
    if has_bias:
        total += 2 * 8 * tn * 4
    total += 2 * tm * tn * out_bytes                 # output tile
    total += tn * in_f * est_bytes                   # w_est scratch (single)
    total += 6 * tn * max(kc, 128) * 4               # quant-phase f32 temporaries
    return total


def _select_tiles(m, out_f, in_f, r, kc, x_bytes, w_bytes, est_bytes,
                  lora_bytes, out_bytes, has_bias, budget, block_n, block_m):
    out_cap = _round_up(max(out_f, 1), 128)
    m_cap = _round_up(max(m, 1), 8)
    tn_cands = [block_n] if block_n is not None else [1024, 512, 256, 128]
    tm_cands = ([block_m] if block_m is not None
                else [512, 256, 128, 64, 32, 16, 8])
    for tn in tn_cands:
        tn = min(tn, out_cap)
        if block_n is None:
            # Keep >= 2 out-feature tiles when possible so the "parallel" grid
            # axis can split across TensorCores (v7x has 2 per chip).
            while tn > 128 and _round_up(out_f, tn) // tn < 2:
                tn = max(128, tn // 2)
        for tm in tm_cands:
            tm = min(tm, m_cap)
            if _vmem_estimate(tm, tn, in_f, r, kc, x_bytes, w_bytes, est_bytes,
                              lora_bytes, out_bytes, 2, has_bias) <= budget:
                return tn, tm
    return min(tn_cands[-1], out_cap), min(tm_cands[-1], m_cap)


# ---------------------------------------------------------------------------
# Wrapper
# ---------------------------------------------------------------------------
def hqq_lora_fakequant_forward(x, w_base, lora_A, lora_B, bias=None, *,
                               scaling, nbits=8,
                               block_n=None, block_m=None, block_k=None,
                               weight_stream_dtype=None, compute_dtype=None):
    """Forward of HQQLinearLoRAWithFakeQuant.

    x: [..., in_features]; w_base: [out_features, in_features] (nn.Linear
    weight layout); lora_A: [in_features, r]; lora_B: [r, out_features];
    bias: [out_features] or None.

    weight_stream_dtype: optionally stream the base weight in a narrower dtype
        (e.g. jnp.bfloat16) - halves weight HBM traffic; quant math stays f32.
    compute_dtype: dtype of the MXU matmul operands (x and the dequantized
        weight). Defaults to x.dtype for strict parity with PyTorch; pass
        jnp.bfloat16 for the fast path when x is float32 (f32 accumulation).
    """
    x_dtype = x.dtype
    in_f = x.shape[-1]
    out_f, in_f_w = w_base.shape
    assert in_f_w == in_f, "w_base must be [out_features, in_features]"
    r = lora_A.shape[1]
    assert lora_A.shape == (in_f, r) and lora_B.shape == (r, out_f)
    lead = x.shape[:-1]

    compute_dtype = jnp.dtype(x_dtype if compute_dtype is None else compute_dtype)
    w_stream = (w_base if weight_stream_dtype is None
                else w_base.astype(weight_stream_dtype))
    la_t = lora_A.T                          # [r, in_f]: lane-dense LoRA operand

    x2 = x.reshape(-1, in_f).astype(compute_dtype)
    m = x2.shape[0]
    has_bias = bias is not None

    # K-chunk for the fake-quant phase (bounds f32 temporaries to [tn, kc]).
    if block_k is not None:
        assert in_f % block_k == 0, "block_k must divide in_features"
        kc = int(block_k)
    else:
        kc = _pick_chunk(in_f)
    n_chunks = in_f // kc

    x_bytes = compute_dtype.itemsize
    w_bytes = jnp.dtype(w_stream.dtype).itemsize
    est_bytes = compute_dtype.itemsize
    lora_bytes = jnp.dtype(lora_A.dtype).itemsize
    out_bytes = jnp.dtype(x_dtype).itemsize

    # Generation-aware tiling: derive tile caps and the scoped-VMEM limit from
    # the chip's VMEM capacity (128 MiB on v5e/v6e, 64 MiB per core on v7x).
    vmem_cap = _vmem_capacity_bytes()
    budget = (vmem_cap * 5) // 8

    if block_n is not None:
        assert block_n % 128 == 0, "block_n must be a multiple of 128"
    if block_m is not None:
        assert block_m % 8 == 0, "block_m must be a multiple of 8"

    tn, tm = _select_tiles(m, out_f, in_f, r, kc, x_bytes, w_bytes, est_bytes,
                           lora_bytes, out_bytes, has_bias, budget,
                           block_n, block_m)

    # Triple-buffer the weight stream when it fits the budget, so the next
    # out-tile's weight DMA is hidden behind two m-steps instead of one.
    w_bufs = 3 if _vmem_estimate(tm, tn, in_f, r, kc, x_bytes, w_bytes,
                                 est_bytes, lora_bytes, out_bytes, 3,
                                 has_bias) <= budget else 2

    # Pad M and out_features up to tile multiples.
    m_p = _round_up(max(m, 1), tm)
    out_p = _round_up(out_f, tn)
    if m_p != m:
        x2 = jnp.pad(x2, ((0, m_p - m), (0, 0)))
    if out_p != out_f:
        w_stream = jnp.pad(w_stream, ((0, out_p - out_f), (0, 0)))
        lora_B = jnp.pad(lora_B, ((0, 0), (0, out_p - out_f)))
    n_tiles = out_p // tn
    m_tiles = m_p // tm

    bias2 = None
    if has_bias:
        bias2 = bias.reshape(1, out_f)
        if out_p != out_f:
            bias2 = jnp.pad(bias2, ((0, 0), (0, out_p - out_f)))

    kernel = partial(_fakequant_lora_kernel, scaling=float(scaling),
                     nbits=int(nbits), k_chunk=kc, n_chunks=n_chunks,
                     has_bias=has_bias)

    flops = 2 * m * in_f * out_f + 2 * in_f * r * out_f
    bytes_accessed = int(
        n_tiles * m_p * in_f * x_bytes            # x is re-streamed per out-tile
        + out_p * in_f * w_bytes                  # base weight
        + r * in_f * lora_bytes                   # lora_A^T
        + r * out_p * lora_bytes                  # lora_B
        + (out_p * bias2.dtype.itemsize if has_bias else 0)
        + m_p * out_p * out_bytes)                # output
    cost = pl.CostEstimate(flops=int(flops), transcendentals=0,
                           bytes_accessed=bytes_accessed)

    vmem_limit = int(min(vmem_cap * 3 // 4, budget + (8 << 20)))

    def _run(deep_weight_buffering):
        if deep_weight_buffering:
            w_spec = pl.BlockSpec((tn, in_f), lambda ni, mi: (ni, 0),
                                  pipeline_mode=pl.Buffered(3))
        else:
            w_spec = pl.BlockSpec((tn, in_f), lambda ni, mi: (ni, 0))
        in_specs = [
            pl.BlockSpec((tm, in_f), lambda ni, mi: (mi, 0)),    # x tile
            w_spec,                                              # weight [out, in]
            pl.BlockSpec((r, in_f), lambda ni, mi: (0, 0)),      # lora_A^T (whole)
            pl.BlockSpec((r, tn), lambda ni, mi: (0, ni)),       # lora_B tile
        ]
        args = [x2, w_stream, la_t, lora_B]
        if has_bias:
            in_specs.append(pl.BlockSpec((1, tn), lambda ni, mi: (0, ni)))
            args.append(bias2)
        return pl.pallas_call(
            kernel,
            out_shape=jax.ShapeDtypeStruct((m_p, out_p), x_dtype),
            grid=(n_tiles, m_tiles),
            in_specs=in_specs,
            out_specs=pl.BlockSpec((tm, tn), lambda ni, mi: (mi, ni)),
            scratch_shapes=[pltpu.VMEM((tn, in_f), compute_dtype)],
            compiler_params=pltpu.CompilerParams(
                dimension_semantics=("parallel", "arbitrary"),
                vmem_limit_bytes=vmem_limit),
            cost_estimate=cost,
        )(*args)

    if w_bufs == 3 and hasattr(pl, "Buffered"):
        try:
            out2d = _run(True)
        except Exception:
            # BlockSpec.pipeline_mode / pl.Buffered unsupported in this JAX
            # build -> fall back to the default double-buffered pipeline.
            out2d = _run(False)
    else:
        out2d = _run(False)

    out2d = out2d[:m, :out_f]
    return out2d.reshape(*lead, out_f)


# ---------------------------------------------------------------------------
# Plain-JAX reference mirroring the PyTorch forward
# ---------------------------------------------------------------------------
def _reference(x, w_base, lora_A, lora_B, bias, *, scaling, nbits=8):
    x_dtype = x.dtype
    W = w_base.astype(jnp.float32)                                # [out, in]
    W = W + scaling * (lora_A.astype(jnp.float32)
                       @ lora_B.astype(jnp.float32)).T
    w_min = W.min(axis=1, keepdims=True)
    w_max = W.max(axis=1, keepdims=True)
    max_v = float(2 ** nbits - 1)
    scale = jnp.minimum(max_v / (w_max - w_min), 2e4)
    zero = -w_min * scale
    w_q = jnp.clip(jnp.round(W * scale + zero), 0.0, max_v)
    w_est = ((w_q - zero) / scale).astype(x_dtype)
    out = x @ w_est.T
    if bias is not None:
        out = out + bias
    return out.astype(x_dtype)


if __name__ == "__main__":
    key = jax.random.PRNGKey(0)
    keys = jax.random.split(key, 9)

    # ---------------- Run 1: strict-parity path (f32 MXU matmul) -----------
    # Small shapes but multi-tile along every axis the kernel tiles:
    # 2 out-feature tiles, 2 M tiles, and 2 K chunks for the quant phase.
    B, S = 2, 8
    in_features, out_features, r = 256, 256, 8
    lora_alpha = 16.0
    scaling = lora_alpha / r

    bound = 1.0 / (in_features ** 0.5)
    x = jax.random.normal(keys[0], (B, S, in_features), dtype=jnp.float32)
    w_base = jax.random.uniform(keys[1], (out_features, in_features),
                                dtype=jnp.float32, minval=-bound, maxval=bound)
    lora_A = 0.05 * jax.random.normal(keys[2], (in_features, r), dtype=jnp.float32)
    lora_B = 0.05 * jax.random.normal(keys[3], (r, out_features), dtype=jnp.float32)
    bias = 0.1 * jax.random.normal(keys[4], (out_features,), dtype=jnp.float32)

    out = hqq_lora_fakequant_forward(
        x, w_base, lora_A, lora_B, bias,
        scaling=scaling, nbits=8, block_n=128, block_m=8, block_k=128)
    out = jax.block_until_ready(out)

    ref = _reference(x, w_base, lora_A, lora_B, bias, scaling=scaling, nbits=8)
    assert out.shape == (B, S, out_features)
    assert jnp.allclose(out, ref, rtol=2e-2, atol=2e-2), "strict path mismatch"

    # ------- Run 2: fast path (bf16 weight streaming + bf16 MXU matmul) ----
    # Odd shapes exercise M / out_features padding, the no-bias branch and
    # the automatic (VMEM-capacity-aware) tile selection.
    B2, S2 = 3, 7
    in2, out2, r2 = 200, 192, 8
    scaling2 = 16.0 / r2
    bound2 = 1.0 / (in2 ** 0.5)
    x_b = jax.random.normal(keys[5], (B2, S2, in2), dtype=jnp.float32)
    w_b = jax.random.uniform(keys[6], (out2, in2), dtype=jnp.float32,
                             minval=-bound2, maxval=bound2)
    a_b = 0.05 * jax.random.normal(keys[7], (in2, r2), dtype=jnp.float32)
    b_b = 0.05 * jax.random.normal(keys[8], (r2, out2), dtype=jnp.float32)

    out_fast = hqq_lora_fakequant_forward(
        x_b, w_b, a_b, b_b, None, scaling=scaling2, nbits=8,
        weight_stream_dtype=jnp.bfloat16, compute_dtype=jnp.bfloat16)
    out_fast = jax.block_until_ready(out_fast)

    ref_fast = _reference(x_b, w_b, a_b, b_b, None, scaling=scaling2, nbits=8)
    assert out_fast.shape == (B2, S2, out2)
    # Loose check: this path intentionally trades precision (bf16 weight
    # streaming + bf16 MXU operands) for ~2x HBM / MXU throughput.
    assert jnp.allclose(out_fast, ref_fast, rtol=1e-1, atol=1e-1), \
        "fast path mismatch"

    print("KERNEL_OK")
</pallas_src>

<mosaic_0001>
module attributes {stable_mosaic.version = 11 : i64} {
  func.func @_fakequant_lora_kernel(%arg0: i32, %arg1: i32, %arg2: memref<8x256xf32, #tpu.memory_space<vmem>>, %arg3: memref<128x256xf32, #tpu.memory_space<vmem>>, %arg4: memref<8x256xf32, #tpu.memory_space<vmem>>, %arg5: memref<8x128xf32, #tpu.memory_space<vmem>>, %arg6: memref<1x128xf32, #tpu.memory_space<vmem>>, %arg7: memref<8x128xf32, #tpu.memory_space<vmem>>, %arg8: memref<128x256xf32, #tpu.memory_space<vmem>>) attributes {dimension_semantics = [#tpu.dimension_semantics<parallel>, #tpu.dimension_semantics<arbitrary>], iteration_bounds = array<i64: 2, 2>, scalar_prefetch = 0 : i64, scratch_operands = 1 : i64, tpu.core_type = #tpu.core_type<tc>, window_params = [{transform_indices = @transform_0, window_bounds = array<i64: 8, 256>}, {transform_indices = @transform_1, window_bounds = array<i64: 128, 256>}, {pipeline_mode = #tpu.pipeline_mode<synchronous>, transform_indices = @transform_2, window_bounds = array<i64: 8, 256>}, {transform_indices = @transform_3, window_bounds = array<i64: 8, 128>}, {transform_indices = @transform_4, window_bounds = array<i64: 1, 128>}, {transform_indices = @transform_5, window_bounds = array<i64: 8, 128>}]} {
    %c0_i32 = arith.constant 0 : i32
    %0 = arith.cmpi eq, %arg1, %c0_i32 : i32
    %1 = arith.extui %0 : i1 to i32
    %c0_i32_0 = arith.constant 0 : i32
    %2 = arith.cmpi ne, %1, %c0_i32_0 : i32
    scf.if %2 {
      %c0_8 = arith.constant 0 : index
      %c0_9 = arith.constant 0 : index
      %10 = vector.load %arg5[%c0_8, %c0_9] : memref<8x128xf32, #tpu.memory_space<vmem>>, vector<8x128xf32>
      %c0_10 = arith.constant 0 : index
      %c0_11 = arith.constant 0 : index
      %11 = vector.load %arg3[%c0_10, %c0_11] : memref<128x256xf32, #tpu.memory_space<vmem>>, vector<128x128xf32>
      %c0_12 = arith.constant 0 : index
      %c0_13 = arith.constant 0 : index
      %12 = vector.load %arg4[%c0_12, %c0_13] : memref<8x256xf32, #tpu.memory_space<vmem>>, vector<8x128xf32>
      %cst_14 = arith.constant dense<0.000000e+00> : vector<128x128xf32>
      %13 = tpu.matmul %10, %12, %cst_14 {dimension_numbers = #tpu.dot_dimension_numbers<[0], [0], [1], [1], [0, 1, 1, 1], [], []>} : vector<8x128xf32>, vector<8x128xf32>, vector<128x128xf32> -> vector<128x128xf32>
      %cst_15 = arith.constant 2.000000e+00 : f32
      %14 = vector.broadcast %cst_15 : f32 to vector<128x128xf32>
      %15 = arith.mulf %14, %13 : vector<128x128xf32>
      %16 = arith.addf %11, %15 : vector<128x128xf32>
      %cst_16 = arith.constant dense<0x7F800000> : vector<128xf32>
      %17 = vector.multi_reduction <minimumf>, %16, %cst_16 [1] : vector<128x128xf32> to vector<128xf32>
      %18 = vector.shape_cast %17 : vector<128xf32> to vector<128x1xf32>
      %cst_17 = arith.constant dense<0xFF800000> : vector<128xf32>
      %19 = vector.multi_reduction <maximumf>, %16, %cst_17 [1] : vector<128x128xf32> to vector<128xf32>
      %20 = vector.shape_cast %19 : vector<128xf32> to vector<128x1xf32>
      %c0_18 = arith.constant 0 : index
      %c128 = arith.constant 128 : index
      %21 = vector.load %arg3[%c0_18, %c128] : memref<128x256xf32, #tpu.memory_space<vmem>>, vector<128x128xf32>
      %c0_19 = arith.constant 0 : index
      %c128_20 = arith.constant 128 : index
      %22 = vector.load %arg4[%c0_19, %c128_20] : memref<8x256xf32, #tpu.memory_space<vmem>>, vector<8x128xf32>
      %cst_21 = arith.constant dense<0.000000e+00> : vector<128x128xf32>
      %23 = tpu.matmul %10, %22, %cst_21 {dimension_numbers = #tpu.dot_dimension_numbers<[0], [0], [1], [1], [0, 1, 1, 1], [], []>} : vector<8x128xf32>, vector<8x128xf32>, vector<128x128xf32> -> vector<128x128xf32>
      %cst_22 = arith.constant 2.000000e+00 : f32
      %24 = vector.broadcast %cst_22 : f32 to vector<128x128xf32>
      %25 = arith.mulf %24, %23 : vector<128x128xf32>
      %26 = arith.addf %21, %25 : vector<128x128xf32>
      %cst_23 = arith.constant dense<0x7F800000> : vector<128xf32>
      %27 = vector.multi_reduction <minimumf>, %26, %cst_23 [1] : vector<128x128xf32> to vector<128xf32>
      %28 = vector.shape_cast %27 : vector<128xf32> to vector<128x1xf32>
      %cst_24 = arith.constant dense<0xFF800000> : vector<128xf32>
      %29 = vector.multi_reduction <maximumf>, %26, %cst_24 [1] : vector<128x128xf32> to vector<128xf32>
      %30 = vector.shape_cast %29 : vector<128xf32> to vector<128x1xf32>
      %31 = arith.minimumf %18, %28 : vector<128x1xf32>
      %32 = arith.maximumf %20, %30 : vector<128x1xf32>
      %33 = arith.subf %32, %31 : vector<128x1xf32>
      %cst_25 = arith.constant 2.550000e+02 : f32
      %34 = vector.broadcast %cst_25 : f32 to vector<128x1xf32>
      %35 = arith.divf %34, %33 : vector<128x1xf32>
      %cst_26 = arith.constant 2.000000e+04 : f32
      %36 = vector.broadcast %cst_26 : f32 to vector<128x1xf32>
      %37 = arith.minimumf %35, %36 : vector<128x1xf32>
      %cst_27 = arith.constant 0.000000e+00 : f32
      %38 = vector.broadcast %cst_27 : f32 to vector<128x1xf32>
      %39 = arith.subf %38, %31 : vector<128x1xf32>
      %40 = arith.mulf %39, %37 : vector<128x1xf32>
      %cst_28 = arith.constant 1.000000e+00 : f32
      %41 = vector.broadcast %cst_28 : f32 to vector<128x1xf32>
      %42 = arith.divf %41, %37 : vector<128x1xf32>
      %c0_29 = arith.constant 0 : index
      %c0_30 = arith.constant 0 : index
      %43 = vector.load %arg3[%c0_29, %c0_30] : memref<128x256xf32, #tpu.memory_space<vmem>>, vector<128x128xf32>
      %c0_31 = arith.constant 0 : index
      %c0_32 = arith.constant 0 : index
      %44 = vector.load %arg4[%c0_31, %c0_32] : memref<8x256xf32, #tpu.memory_space<vmem>>, vector<8x128xf32>
      %cst_33 = arith.constant dense<0.000000e+00> : vector<128x128xf32>
      %45 = tpu.matmul %10, %44, %cst_33 {dimension_numbers = #tpu.dot_dimension_numbers<[0], [0], [1], [1], [0, 1, 1, 1], [], []>} : vector<8x128xf32>, vector<8x128xf32>, vector<128x128xf32> -> vector<128x128xf32>
      %cst_34 = arith.constant 2.000000e+00 : f32
      %46 = vector.broadcast %cst_34 : f32 to vector<128x128xf32>
      %47 = arith.mulf %46, %45 : vector<128x128xf32>
      %48 = arith.addf %43, %47 : vector<128x128xf32>
      %49 = vector.broadcast %37 : vector<128x1xf32> to vector<128x128xf32>
      %50 = arith.mulf %48, %49 : vector<128x128xf32>
      %51 = vector.broadcast %40 : vector<128x1xf32> to vector<128x128xf32>
      %52 = arith.addf %50, %51 : vector<128x128xf32>
      %53 = math.roundeven %52 : vector<128x128xf32>
      %cst_35 = arith.constant 0.000000e+00 : f32
      %cst_36 = arith.constant 2.550000e+02 : f32
      %54 = vector.broadcast %cst_35 : f32 to vector<128x128xf32>
      %55 = arith.maximumf %54, %53 : vector<128x128xf32>
      %56 = vector.broadcast %cst_36 : f32 to vector<128x128xf32>
      %57 = arith.minimumf %56, %55 : vector<128x128xf32>
      %58 = vector.broadcast %40 : vector<128x1xf32> to vector<128x128xf32>
      %59 = arith.subf %57, %58 : vector<128x128xf32>
      %60 = vector.broadcast %42 : vector<128x1xf32> to vector<128x128xf32>
      %61 = arith.mulf %59, %60 : vector<128x128xf32>
      %c0_37 = arith.constant 0 : index
      %c0_38 = arith.constant 0 : index
      %62 = vector.load %arg8[%c0_37, %c0_38] : memref<128x256xf32, #tpu.memory_space<vmem>>, vector<128x128xf32>
      tpu.vector_store %arg8[%c0_37, %c0_38], %61 {strides = array<i32>} : memref<128x256xf32, #tpu.memory_space<vmem>>, vector<128x128xf32>,
      %c0_39 = arith.constant 0 : index
      %c128_40 = arith.constant 128 : index
      %63 = vector.load %arg3[%c0_39, %c128_40] : memref<128x256xf32, #tpu.memory_space<vmem>>, vector<128x128xf32>
      %c0_41 = arith.constant 0 : index
      %c128_42 = arith.constant 128 : index
      %64 = vector.load %arg4[%c0_41, %c128_42] : memref<8x256xf32, #tpu.memory_space<vmem>>, vector<8x128xf32>
      %cst_43 = arith.constant dense<0.000000e+00> : vector<128x128xf32>
      %65 = tpu.matmul %10, %64, %cst_43 {dimension_numbers = #tpu.dot_dimension_numbers<[0], [0], [1], [1], [0, 1, 1, 1], [], []>} : vector<8x128xf32>, vector<8x128xf32>, vector<128x128xf32> -> vector<128x128xf32>
      %cst_44 = arith.constant 2.000000e+00 : f32
      %66 = vector.broadcast %cst_44 : f32 to vector<128x128xf32>
      %67 = arith.mulf %66, %65 : vector<128x128xf32>
      %68 = arith.addf %63, %67 : vector<128x128xf32>
      %69 = vector.broadcast %37 : vector<128x1xf32> to vector<128x128xf32>
      %70 = arith.mulf %68, %69 : vector<128x128xf32>
      %71 = vector.broadcast %40 : vector<128x1xf32> to vector<128x128xf32>
      %72 = arith.addf %70, %71 : vector<128x128xf32>
      %73 = math.roundeven %72 : vector<128x128xf32>
      %cst_45 = arith.constant 0.000000e+00 : f32
      %cst_46 = arith.constant 2.550000e+02 : f32
      %74 = vector.broadcast %cst_45 : f32 to vector<128x128xf32>
      %75 = arith.maximumf %74, %73 : vector<128x128xf32>
      %76 = vector.broadcast %cst_46 : f32 to vector<128x128xf32>
      %77 = arith.minimumf %76, %75 : vector<128x128xf32>
      %78 = vector.broadcast %40 : vector<128x1xf32> to vector<128x128xf32>
      %79 = arith.subf %77, %78 : vector<128x128xf32>
      %80 = vector.broadcast %42 : vector<128x1xf32> to vector<128x128xf32>
      %81 = arith.mulf %79, %80 : vector<128x128xf32>
      %c0_47 = arith.constant 0 : index
      %c128_48 = arith.constant 128 : index
      %82 = vector.load %arg8[%c0_47, %c128_48] : memref<128x256xf32, #tpu.memory_space<vmem>>, vector<128x128xf32>
      tpu.vector_store %arg8[%c0_47, %c128_48], %81 {strides = array<i32>} : memref<128x256xf32, #tpu.memory_space<vmem>>, vector<128x128xf32>,
    } else {
    }
    %c0 = arith.constant 0 : index
    %c0_1 = arith.constant 0 : index
    %3 = vector.load %arg2[%c0, %c0_1] : memref<8x256xf32, #tpu.memory_space<vmem>>, vector<8x256xf32>
    %c0_2 = arith.constant 0 : index
    %c0_3 = arith.constant 0 : index
    %4 = vector.load %arg8[%c0_2, %c0_3] : memref<128x256xf32, #tpu.memory_space<vmem>>, vector<128x256xf32>
    %cst = arith.constant dense<0.000000e+00> : vector<8x128xf32>
    %5 = tpu.matmul %3, %4, %cst {dimension_numbers = #tpu.dot_dimension_numbers<[1], [1], [0], [0], [0, 0, 1, 0], [], []>} : vector<8x256xf32>, vector<128x256xf32>, vector<8x128xf32> -> vector<8x128xf32>
    %c0_4 = arith.constant 0 : index
    %c0_5 = arith.constant 0 : index
    %6 = vector.load %arg6[%c0_4, %c0_5] : memref<1x128xf32, #tpu.memory_space<vmem>>, vector<1x128xf32>
    %7 = vector.broadcast %6 : vector<1x128xf32> to vector<8x128xf32>
    %8 = arith.addf %5, %7 : vector<8x128xf32>
    %c0_6 = arith.constant 0 : index
    %c0_7 = arith.constant 0 : index
    %9 = vector.load %arg7[%c0_6, %c0_7] : memref<8x128xf32, #tpu.memory_space<vmem>>, vector<8x128xf32>
    tpu.vector_store %arg7[%c0_6, %c0_7], %8 {strides = array<i32>} : memref<8x128xf32, #tpu.memory_space<vmem>>, vector<8x128xf32>,
    return
  }
  func.func @transform_0(%arg0: i32, %arg1: i32) -> (i32, i32) {
    %c0_i32 = arith.constant 0 : i32
    %c0_i32_0 = arith.constant 0 : i32
    return %arg1, %c0_i32 : i32, i32
  }
  func.func @transform_1(%arg0: i32, %arg1: i32) -> (i32, i32) {
    %c0_i32 = arith.constant 0 : i32
    %c0_i32_0 = arith.constant 0 : i32
    return %arg0, %c0_i32 : i32, i32
  }
  func.func @transform_2(%arg0: i32, %arg1: i32) -> (i32, i32) {
    %c0_i32 = arith.constant 0 : i32
    %c0_i32_0 = arith.constant 0 : i32
    %c0_i32_1 = arith.constant 0 : i32
    return %c0_i32, %c0_i32_0 : i32, i32
  }
  func.func @transform_3(%arg0: i32, %arg1: i32) -> (i32, i32) {
    %c0_i32 = arith.constant 0 : i32
    %c0_i32_0 = arith.constant 0 : i32
    return %c0_i32, %arg0 : i32, i32
  }
  func.func @transform_4(%arg0: i32, %arg1: i32) -> (i32, i32) {
    %c0_i32 = arith.constant 0 : i32
    %c0_i32_0 = arith.constant 0 : i32
    return %c0_i32, %arg0 : i32, i32
  }
  func.func @transform_5(%arg0: i32, %arg1: i32) -> (i32, i32) {
    %c0_i32 = arith.constant 0 : i32
    return %arg1, %arg0 : i32, i32
  }
}

</mosaic_0001>

<llo_original>
// kernel: tpu_custom_call.1
$region0: #{tpu_custom_call.1}
  #allocation0 [shape = 'u32[]', space=smem, size = 0x4, offset = 0x4, fixed_abs, tag = 'smem constant byte address 0x4 - core index']
  #allocation1 [shape = 'u32[144,128]{1,0:T(1,128)}', space=vmem, size = 0x12000, scoped, tag = 'internal scratch']
  #allocation2 [shape = 'f32[128,256]{1,0:T(8,128)}', space=vmem, size = 0x20000, scoped, tag = 'scratch operand']
  %s0 = inlined_call_operand.hbm [shape: f32[16,256], index: 0, kind: input, shape index: {}]
  %s1 = inlined_call_operand.hbm [shape: f32[256,256], index: 1, kind: input, shape index: {}]
  %s2 = inlined_call_operand.hbm [shape: f32[8,256], index: 2, kind: input, shape index: {}]
  %s3 = inlined_call_operand.hbm [shape: f32[8,256], index: 3, kind: input, shape index: {}]
  %s4 = inlined_call_operand.vmem [shape: f32[1,256], index: 4, kind: input, shape index: {}]
  %s5 = inlined_call_operand.hbm [shape: f32[16,256], index: 5, kind: output, shape index: {}]
  %s6 = sld [smem:[#allocation0]]
  $region73: #{tpu_custom_call.1} parent=0
    _
  %s8 = ssub.s32 1, %s6
  %s9 = scalar_select 0, %s8, %s6
  $region1: #{tpu_custom_call.1} parent=0
    #allocation3 [shape = 'u8[16384]{0}', space=vmem, size = 0x4000, scoped, tag = 'input window, operand 0']
    #allocation4 [shape = 's32[2]{0}', space=sflag, size = 0x8, scoped, tag = 'scoped memory for tpu_custom_call.1']
    #allocation5 [shape = 's32[2]{0}', space=sflag, size = 0x8, scoped, tag = 'scoped memory for tpu_custom_call.1']
    #allocation6 [shape = 'u8[262144]{0}', space=vmem, size = 0x40000, scoped, tag = 'input window, operand 1']
    #allocation7 [shape = 's32[2]{0}', space=sflag, size = 0x8, scoped, tag = 'scoped memory for tpu_custom_call.1']
    #allocation8 [shape = 'u8[8192]{0}', space=vmem, size = 0x2000, scoped, tag = 'input window, operand 2, single buffered']
    #allocation9 [shape = 'u8[8192]{0}', space=vmem, size = 0x2000, scoped, tag = 'input window, operand 3']
    #allocation10 [shape = 's32[2]{0}', space=sflag, size = 0x8, scoped, tag = 'scoped memory for tpu_custom_call.1']
    #allocation11 [shape = 'u8[8192]{0}', space=vmem, size = 0x2000, scoped, tag = 'output window, operand 0']
    %10 = vsyncpa [#allocation4], 0
    %s11 = scalar_lea.sflag [#allocation4], 1
    %12 = vsyncpa %s11, 0
    %13 = vsyncpa [#allocation7], 0
    %s14 = scalar_lea.sflag [#allocation7], 1
    %15 = vsyncpa %s14, 0
    %16 = vsyncpa [#allocation10], 0
    %s17 = scalar_lea.sflag [#allocation10], 1
    %18 = vsyncpa %s17, 0
    %19 = vsyncpa [#allocation5], 0
    %s20 = scalar_lea.sflag [#allocation5], 1
    %21 = vsyncpa %s20, 0
    loop: start=0, step=1, limit=6
    $region2: #{tpu_custom_call.1} parent=1 // loop_pre_header
      _
    $region3: #{tpu_custom_call.1} parent=1 // loop_header
      %s23 = sphi 0, %s27
      %p24 = scmp.ge.s32.totalorder %s23, 6
      %s30 = sphi 0, %s42
      %s31 = sphi 0, %s38
      %s32 = sphi 0, %s30
      %s33 = sphi 0, %s31
      %s34 = sphi 0, %s32
      %s35 = sphi 0, %s33
      %s45 = sphi 0, %s47
      %s48 = sphi 0, %s45
      %s49 = sphi 0, %s48
      %s65 = sphi 0, %s49
      %s71 = sphi 0, %s73
      %s74 = sphi 0, %s71
      %s75 = sphi 0, %s74
      %s91 = sphi 0, %s75
      %s95 = sphi 0, %s95
      %s97 = sphi 0, %s95
      %s98 = sphi 0, %s97
      %s112 = sphi 0, %s98
      %s118 = sphi 0, %s120
      %s121 = sphi 0, %s118
      %s122 = sphi 0, %s121
      %s138 = sphi 0, %s122
      %s144 = sphi 0, %s146
      %s147 = sphi 0, %s144
      %s148 = sphi 0, %s147
      %s164 = sphi 0, %s148
      %s172 = sphi 0, %s174
      %s175 = sphi 0, %s172
      %s176 = sphi 0, %s175
      %s192 = sphi 0, %s176
    $region4: #{tpu_custom_call.1} parent=1 // loop_header_branch
      %26 = sbr.rel (%p24) target = $region8
    $region5: #{tpu_custom_call.1} parent=1 // loop_body
      %s28 = ssub.s32 %s23, 1
      %s29 = ssub.s32 %s23, 2
      %s36 = sadd.s32 1, %s31
      %p37 = scmp.ge.s32.totalorder %s36, 2
      %s38 = scalar_select %p37, 0, %s36
      %s39 = sadd.s32 1, %s30
      %s40 = scalar_select %p37, %s39, %s30
      %p41 = scmp.ge.s32.totalorder %s40, 2
      %s42 = scalar_select %p41, 0, %s40
      %s43 = ssub.s32 %s31, %s38
      %p44 = scmp.eq.s32.totalorder %s43, 0
      %s46 = sadd.s32 %s45, 1
      %s47 = scalar_select %p44, %s45, %s46
      %p50 = pneg %p44
      %p51 = scmp.eq.s32.totalorder %s23, 3
      %p52 = por %p50, %p51
      %p53 = scmp.ne.s32.totalorder %s45, %s48
      %p54 = scmp.eq.s32.totalorder %s23, 0
      %p55 = por %p53, %p54
      %p56 = scmp.ne.s32.totalorder %s45, %s48
      %p57 = scmp.eq.s32.totalorder %s28, 3
      %p58 = por %p56, %p57
      %p59 = scmp.ne.s32.totalorder %s48, %s49
      %p60 = scmp.eq.s32.totalorder %s28, 0
      %p61 = por %p59, %p60
      %p62 = scmp.ne.s32.totalorder %s48, %s49
      %p63 = scmp.eq.s32.totalorder %s29, 3
      %p64 = por %p62, %p63
      %p66 = scmp.ne.s32.totalorder %s49, %s65
      %p67 = scmp.eq.s32.totalorder %s29, 0
      %p68 = por %p66, %p67
      %s69 = ssub.s32 %s30, %s42
      %p70 = scmp.eq.s32.totalorder %s69, 0
      %s72 = sadd.s32 %s71, 1
      %s73 = scalar_select %p70, %s71, %s72
      %p76 = pneg %p70
      %p77 = scmp.eq.s32.totalorder %s23, 3
      %p78 = por %p76, %p77
      %p79 = scmp.ne.s32.totalorder %s71, %s74
      %p80 = scmp.eq.s32.totalorder %s23, 0
      %p81 = por %p79, %p80
      %p82 = scmp.ne.s32.totalorder %s71, %s74
      %p83 = scmp.eq.s32.totalorder %s28, 3
      %p84 = por %p82, %p83
      %p85 = scmp.ne.s32.totalorder %s74, %s75
      %p86 = scmp.eq.s32.totalorder %s28, 0
      %p87 = por %p85, %p86
      %p88 = scmp.ne.s32.totalorder %s74, %s75
      %p89 = scmp.eq.s32.totalorder %s29, 3
      %p90 = por %p88, %p89
      %p92 = scmp.ne.s32.totalorder %s75, %s91
      %p93 = scmp.eq.s32.totalorder %s29, 0
      %p94 = por %p92, %p93
      %s96 = sadd.s32 %s95, 1
      %p99 = scmp.eq.s32.totalorder %s23, 3
      %p100 = scmp.ne.s32.totalorder %s95, %s97
      %p101 = scmp.eq.s32.totalorder %s23, 0
      %p102 = por %p100, %p101
      %p103 = scmp.ne.s32.totalorder %s95, %s97
      %p104 = scmp.eq.s32.totalorder %s28, 3
      %p105 = por %p103, %p104
      %p106 = scmp.ne.s32.totalorder %s97, %s98
      %p107 = scmp.eq.s32.totalorder %s28, 0
      %p108 = por %p106, %p107
      %p109 = scmp.ne.s32.totalorder %s97, %s98
      %p110 = scmp.eq.s32.totalorder %s29, 3
      %p111 = por %p109, %p110
      %p113 = scmp.ne.s32.totalorder %s98, %s112
      %p114 = scmp.eq.s32.totalorder %s29, 0
      %p115 = por %p113, %p114
      %s116 = ssub.s32 %s30, %s42
      %p117 = scmp.eq.s32.totalorder %s116, 0
      %s119 = sadd.s32 %s118, 1
      %s120 = scalar_select %p117, %s118, %s119
      %p123 = pneg %p117
      %p124 = scmp.eq.s32.totalorder %s23, 3
      %p125 = por %p123, %p124
      %p126 = scmp.ne.s32.totalorder %s118, %s121
      %p127 = scmp.eq.s32.totalorder %s23, 0
      %p128 = por %p126, %p127
      %p129 = scmp.ne.s32.totalorder %s118, %s121
      %p130 = scmp.eq.s32.totalorder %s28, 3
      %p131 = por %p129, %p130
      %p132 = scmp.ne.s32.totalorder %s121, %s122
      %p133 = scmp.eq.s32.totalorder %s28, 0
      %p134 = por %p132, %p133
      %p135 = scmp.ne.s32.totalorder %s121, %s122
      %p136 = scmp.eq.s32.totalorder %s29, 3
      %p137 = por %p135, %p136
      %p139 = scmp.ne.s32.totalorder %s122, %s138
      %p140 = scmp.eq.s32.totalorder %s29, 0
      %p141 = por %p139, %p140
      %s142 = ssub.s32 %s30, %s42
      %p143 = scmp.eq.s32.totalorder %s142, 0
      %s145 = sadd.s32 %s144, 1
      %s146 = scalar_select %p143, %s144, %s145
      %p149 = pneg %p143
      %p150 = scmp.eq.s32.totalorder %s23, 3
      %p151 = por %p149, %p150
      %p152 = scmp.ne.s32.totalorder %s144, %s147
      %p153 = scmp.eq.s32.totalorder %s23, 0
      %p154 = por %p152, %p153
      %p155 = scmp.ne.s32.totalorder %s144, %s147
      %p156 = scmp.eq.s32.totalorder %s28, 3
      %p157 = por %p155, %p156
      %p158 = scmp.ne.s32.totalorder %s147, %s148
      %p159 = scmp.eq.s32.totalorder %s28, 0
      %p160 = por %p158, %p159
      %p161 = scmp.ne.s32.totalorder %s147, %s148
      %p162 = scmp.eq.s32.totalorder %s29, 3
      %p163 = por %p161, %p162
      %p165 = scmp.ne.s32.totalorder %s148, %s164
      %p166 = scmp.eq.s32.totalorder %s29, 0
      %p167 = por %p165, %p166
      %s168 = ssub.s32 %s31, %s38
      %s169 = ssub.s32 %s30, %s42
      %s170 = sor.u32 %s168, %s169
      %p171 = scmp.eq.s32.totalorder %s170, 0
      %s173 = sadd.s32 %s172, 1
      %s174 = scalar_select %p171, %s172, %s173
      %p177 = pneg %p171
      %p178 = scmp.eq.s32.totalorder %s23, 3
      %p179 = por %p177, %p178
      %p180 = scmp.ne.s32.totalorder %s172, %s175
      %p181 = scmp.eq.s32.totalorder %s23, 0
      %p182 = por %p180, %p181
      %p183 = scmp.ne.s32.totalorder %s172, %s175
      %p184 = scmp.eq.s32.totalorder %s28, 3
      %p185 = por %p183, %p184
      %p186 = scmp.ne.s32.totalorder %s175, %s176
      %p187 = scmp.eq.s32.totalorder %s28, 0
      %p188 = por %p186, %p187
      %p189 = scmp.ne.s32.totalorder %s175, %s176
      %p190 = scmp.eq.s32.totalorder %s29, 3
      %p191 = por %p189, %p190
      %p193 = scmp.ne.s32.totalorder %s176, %s192
      %p194 = scmp.eq.s32.totalorder %s29, 0
      %p195 = por %p193, %p194
      %p196 = scmp.le.s32.totalorder 1, %s23
      %p197 = scmp.lt.s32.totalorder %s23, 5
      %p198 = pnand %p196, %p197
      %p199 = pneg %p198
      // Predicated region
      $region9: #{tpu_custom_call.1} parent=5 // pred_check
        _
      $region10: #{tpu_custom_call.1} parent=5 // pred_check_branch
        %201 = sbr.rel (%p198) target = $region12
      $region11: #{tpu_custom_call.1} parent=5 // pred_region
        %s202 = ssub.s32 %s23, 1
        // Predicated region
        $region13: #{tpu_custom_call.1} parent=11 // pred_check
          %p203 = pneg %p108
        $region14: #{tpu_custom_call.1} parent=11 // pred_check_branch
          %205 = sbr.rel (%p203) target = $region16
        $region15: #{tpu_custom_call.1} parent=11 // pred_region
          %s207 = ssub.s32 256, 256
          %208 = vsyncadd [#allocation7], %s207
          %s210 = sshll.u32 [#allocation8], 4
          %s211 = int_to_ptr.vmem [resolvable:$true] %s210
          %213 = dma.hbm_to_vmem [thread:$0]  %s2, 256, %s211, [#allocation7]
        $region16: #{tpu_custom_call.1} parent=11 // pred_fallthru
          _
      $region12: #{tpu_custom_call.1} parent=5 // pred_fallthru
        _
      %p214 = scmp.lt.s32.totalorder %s23, 4
      // Predicated region
      $region17: #{tpu_custom_call.1} parent=5 // pred_check
        %p215 = pneg %p214
      $region18: #{tpu_custom_call.1} parent=5 // pred_check_branch
        %217 = sbr.rel (%p215) target = $region20
      $region19: #{tpu_custom_call.1} parent=5 // pred_region
        // Predicated region
        $region21: #{tpu_custom_call.1} parent=19 // pred_check
          %p218 = pneg %p55
        $region22: #{tpu_custom_call.1} parent=19 // pred_check_branch
          %220 = sbr.rel (%p218) target = $region24
        $region23: #{tpu_custom_call.1} parent=19 // pred_region
          %s221 = sand.u32 %s45, 1
          %s222 = scalar_lea.sflag [#allocation4], %s221
          %s223 = sand.u32 %s45, 1
          %s224 = smul.addr %s223, 16
          %s225 = scalar_lea.vmem [#allocation3], %s224
          %s227 = ssub.s32 256, 256
          %228 = vsyncadd %s222, %s227
          %s229 = smul.addr %s31, 2
          %s230 = smul.addr %s229, 128
          %s231 = scalar_lea.hbm %s0, %s230
          %s233 = sshll.u32 %s225, 4
          %s234 = int_to_ptr.vmem [resolvable:$true] %s233
          %236 = dma.hbm_to_vmem [thread:$0]  %s231, 256, %s234, %s222
        $region24: #{tpu_custom_call.1} parent=19 // pred_fallthru
          _
        // Predicated region
        $region25: #{tpu_custom_call.1} parent=19 // pred_check
          %p237 = pneg %p81
        $region26: #{tpu_custom_call.1} parent=19 // pred_check_branch
          %239 = sbr.rel (%p237) target = $region28
        $region27: #{tpu_custom_call.1} parent=19 // pred_region
          %s240 = sand.u32 %s23, 1
          %s241 = scalar_lea.sflag [#allocation7], %s240
          %s242 = sand.u32 %s71, 1
          %s243 = smul.addr %s242, 256
          %s244 = scalar_lea.vmem [#allocation6], %s243
          %s245 = smul.u32 16, %s30
          %s247 = ssub.s32 4096, 4096
          %248 = vsyncadd %s241, %s247
          %s249 = smul.addr %s245, 2
          %s250 = smul.addr %s249, 128
          %s251 = scalar_lea.hbm %s1, %s250
          %s252 = sshll.u32 %s244, 4
          %s253 = int_to_ptr.vmem [resolvable:$true] %s252
          %258 = dma.hbm_to_vmem [thread:$0]  %s251, 4096, %s253, %s241, 256, 256, 16
        $region28: #{tpu_custom_call.1} parent=19 // pred_fallthru
          _
        // Predicated region
        $region29: #{tpu_custom_call.1} parent=19 // pred_check
          %p259 = pneg %p128
        $region30: #{tpu_custom_call.1} parent=19 // pred_check_branch
          %261 = sbr.rel (%p259) target = $region32
        $region31: #{tpu_custom_call.1} parent=19 // pred_region
          %s262 = sand.u32 %s118, 1
          %s263 = scalar_lea.sflag [#allocation10], %s262
          %s264 = sand.u32 %s118, 1
          %s265 = smul.addr %s264, 8
          %s266 = scalar_lea.vmem [#allocation9], %s265
          %s268 = ssub.s32 128, 128
          %269 = vsyncadd %s263, %s268
          %s270 = smul.addr %s30, 128
          %s271 = scalar_lea.hbm %s3, %s270
          %s273 = sshll.u32 %s266, 4
          %s274 = int_to_ptr.vmem [resolvable:$true] %s273
          %276 = dma.hbm_to_vmem [thread:$0]  %s271, 128, %s274, %s263
        $region32: #{tpu_custom_call.1} parent=19 // pred_fallthru
          _
        // Predicated region
        $region33: #{tpu_custom_call.1} parent=19 // pred_check
          %p277 = pneg %p154
        $region34: #{tpu_custom_call.1} parent=19 // pred_check_branch
          %279 = sbr.rel (%p277) target = $region36
        $region35: #{tpu_custom_call.1} parent=19 // pred_region
          %p280 = scmp.lt.s32.totalorder %s30, 1
          %s281 = scalar_select %p280, %s30, 1
          %s282 = scalar_lea.vmem %s4, %s281
        $region36: #{tpu_custom_call.1} parent=19 // pred_fallthru
          _
      $region20: #{tpu_custom_call.1} parent=5 // pred_fallthru
        _
      %p283 = scmp.le.s32.totalorder 1, %s23
      %p284 = scmp.lt.s32.totalorder %s23, 5
      %p285 = pnand %p283, %p284
      %p286 = pneg %p285
      // Predicated region
      $region37: #{tpu_custom_call.1} parent=5 // pred_check
        _
      $region38: #{tpu_custom_call.1} parent=5 // pred_check_branch
        %288 = sbr.rel (%p285) target = $region40
      $region39: #{tpu_custom_call.1} parent=5 // pred_region
        %s289 = ssub.s32 %s23, 1
        %s290 = sand.u32 %s48, 1
        %s291 = scalar_lea.sflag [#allocation4], %s290
        %s292 = sand.u32 %s48, 1
        %s293 = smul.addr %s292, 16
        %s294 = scalar_lea.vmem [#allocation3], %s293
        // Predicated region
        $region41: #{tpu_custom_call.1} parent=39 // pred_check
          %p295 = pneg %p61
        $region42: #{tpu_custom_call.1} parent=39 // pred_check_branch
          %297 = sbr.rel (%p295) target = $region44
        $region43: #{tpu_custom_call.1} parent=39 // pred_region
          %298 = dma.done %s291, 256
        $region44: #{tpu_custom_call.1} parent=39 // pred_fallthru
          _
        %s299 = sand.u32 %s28, 1
        %s300 = scalar_lea.sflag [#allocation7], %s299
        %s301 = sand.u32 %s74, 1
        %s302 = smul.addr %s301, 256
        %s303 = scalar_lea.vmem [#allocation6], %s302
        // Predicated region
        $region45: #{tpu_custom_call.1} parent=39 // pred_check
          %p304 = pneg %p87
        $region46: #{tpu_custom_call.1} parent=39 // pred_check_branch
          %306 = sbr.rel (%p304) target = $region48
        $region47: #{tpu_custom_call.1} parent=39 // pred_region
          %307 = dma.done %s300, 4096
        $region48: #{tpu_custom_call.1} parent=39 // pred_fallthru
          _
        // Predicated region
        $region49: #{tpu_custom_call.1} parent=39 // pred_check
          %p308 = pneg %p108
        $region50: #{tpu_custom_call.1} parent=39 // pred_check_branch
          %310 = sbr.rel (%p308) target = $region52
        $region51: #{tpu_custom_call.1} parent=39 // pred_region
          %311 = dma.done [#allocation7], 256
        $region52: #{tpu_custom_call.1} parent=39 // pred_fallthru
          _
        %s312 = sand.u32 %s121, 1
        %s313 = scalar_lea.sflag [#allocation10], %s312
        %s314 = sand.u32 %s121, 1
        %s315 = smul.addr %s314, 8
        %s316 = scalar_lea.vmem [#allocation9], %s315
        // Predicated region
        $region53: #{tpu_custom_call.1} parent=39 // pred_check
          %p317 = pneg %p134
        $region54: #{tpu_custom_call.1} parent=39 // pred_check_branch
          %319 = sbr.rel (%p317) target = $region56
        $region55: #{tpu_custom_call.1} parent=39 // pred_region
          %320 = dma.done %s313, 128
        $region56: #{tpu_custom_call.1} parent=39 // pred_fallthru
          _
        %s321 = sand.u32 %s48, 1
        %s322 = scalar_lea.sflag [#allocation4], %s321
        %s323 = sand.u32 %s48, 1
        %s324 = smul.addr %s323, 16
        %s325 = scalar_lea.vmem [#allocation3], %s324
        %p326 = pneg %p61
        %p327 = pneg %p58
        %s328 = sand.u32 %s28, 1
        %s329 = scalar_lea.sflag [#allocation7], %s328
        %s330 = sand.u32 %s74, 1
        %s331 = smul.addr %s330, 256
        %s332 = scalar_lea.vmem [#allocation6], %s331
        %p333 = pneg %p87
        %p334 = pneg %p84
        %p335 = pneg %p108
        %p336 = pneg %p105
        %s337 = sand.u32 %s121, 1
        %s338 = scalar_lea.sflag [#allocation10], %s337
        %s339 = sand.u32 %s121, 1
        %s340 = smul.addr %s339, 8
        %s341 = scalar_lea.vmem [#allocation9], %s340
        %p342 = pneg %p134
        %p343 = pneg %p131
        %p344 = scmp.lt.s32.totalorder %s32, 1
        %s345 = scalar_select %p344, %s32, 1
        %s346 = scalar_lea.vmem %s4, %s345
        %p347 = pneg %p160
        %p348 = pneg %p157
        %p349 = pneg %p188
        %p350 = pneg %p185
        %s351 = sand.u32 %s175, 1
        %s352 = scalar_lea.sflag [#allocation5], %s351
        %s353 = sand.u32 %s175, 1
        %s354 = smul.addr %s353, 8
        %s355 = scalar_lea.vmem [#allocation11], %s354
        %s356 = smul.u32 16, %s32
        %p357 = scmp.lt.s32.totalorder %s32, 1
        %s358 = scalar_select %p357, %s32, 1
        %s359 = scalar_lea.vmem %s4, %s358
        %p360 = scmp.eq.s32.totalorder %s33, 0
        // Predicated region
        $region57: #{tpu_custom_call.1} parent=39 // pred_check
          %p361 = pneg %p360
        $region58: #{tpu_custom_call.1} parent=39 // pred_check_branch
          %363 = sbr.rel (%p361) target = $region60
        $region59: #{tpu_custom_call.1} parent=39 // pred_region
          %v364 = vld [vmem:[%s316] sm:$0xff]
          %v365 = vld [vmem:[%s303] sm:$0xff]
          %v366 = vld [vmem:[%s303 + $0x10] sm:$0xff]
          %v367 = vld [vmem:[%s303 + $0x20] sm:$0xff]
          %v368 = vld [vmem:[%s303 + $0x30] sm:$0xff]
          %v369 = vld [vmem:[%s303 + $0x40] sm:$0xff]
          %v370 = vld [vmem:[%s303 + $0x50] sm:$0xff]
          %v371 = vld [vmem:[%s303 + $0x60] sm:$0xff]
          %v372 = vld [vmem:[%s303 + $0x70] sm:$0xff]
          %v373 = vld [vmem:[%s303 + $0x80] sm:$0xff]
          %v374 = vld [vmem:[%s303 + $0x90] sm:$0xff]
          %v375 = vld [vmem:[%s303 + $0xa0] sm:$0xff]
          %v376 = vld [vmem:[%s303 + $0xb0] sm:$0xff]
          %v377 = vld [vmem:[%s303 + $0xc0] sm:$0xff]
          %v378 = vld [vmem:[%s303 + $0xd0] sm:$0xff]
          %v379 = vld [vmem:[%s303 + $0xe0] sm:$0xff]
          %v380 = vld [vmem:[%s303 + $0xf0] sm:$0xff]
          %v381 = vld [vmem:[#allocation8] sm:$0xff]
          %382 = vxpose.xlu0.b32.start [1/16] %v364, 128
          %383 = vxpose.xlu0.b32.cont [2/16] 0.0, 128
          %384 = vxpose.xlu0.b32.cont [3/16] 0.0, 128
          %385 = vxpose.xlu0.b32.cont [4/16] 0.0, 128
          %386 = vxpose.xlu0.b32.cont [5/16] 0.0, 128
          %387 = vxpose.xlu0.b32.cont [6/16] 0.0, 128
          %388 = vxpose.xlu0.b32.cont [7/16] 0.0, 128
          %389 = vxpose.xlu0.b32.cont [8/16] 0.0, 128
          %390 = vxpose.xlu0.b32.cont [9/16] 0.0, 128
          %391 = vxpose.xlu0.b32.cont [10/16] 0.0, 128
          %392 = vxpose.xlu0.b32.cont [11/16] 0.0, 128
          %393 = vxpose.xlu0.b32.cont [12/16] 0.0, 128
          %394 = vxpose.xlu0.b32.cont [13/16] 0.0, 128
          %395 = vxpose.xlu0.b32.cont [14/16] 0.0, 128
          %396 = vxpose.xlu0.b32.cont [15/16] 0.0, 128
          %397 = vxpose.xlu0.b32.end [16/16] 0.0, 128
          %v398 = vpop.trf.xlu0
          %v399 = vpop.trf.xlu0
          %v400 = vpop.trf.xlu0
          %v401 = vpop.trf.xlu0
          %v402 = vpop.trf.xlu0
          %v403 = vpop.trf.xlu0
          %v404 = vpop.trf.xlu0
          %v405 = vpop.trf.xlu0
          %v406 = vpop.trf.xlu0
          %v407 = vpop.trf.xlu0
          %v408 = vpop.trf.xlu0
          %v409 = vpop.trf.xlu0
          %v410 = vpop.trf.xlu0
          %v411 = vpop.trf.xlu0
          %v412 = vpop.trf.xlu0
          %v413 = vpop.trf.xlu0
          %vm414 = vcmask 64512
          %v416 = vsel %vm414, %v398, 0
          %v419 = vsel %vm414, %v399, 0
          %v422 = vsel %vm414, %v400, 0
          %v425 = vsel %vm414, %v401, 0
          %v428 = vsel %vm414, %v402, 0
          %v431 = vsel %vm414, %v403, 0
          %v434 = vsel %vm414, %v404, 0
          %v437 = vsel %vm414, %v405, 0
          %v440 = vsel %vm414, %v406, 0
          %v443 = vsel %vm414, %v407, 0
          %v446 = vsel %vm414, %v408, 0
          %v449 = vsel %vm414, %v409, 0
          %v452 = vsel %vm414, %v410, 0
          %v455 = vsel %vm414, %v411, 0
          %v458 = vsel %vm414, %v412, 0
          %v461 = vsel %vm414, %v413, 0
          %463 = vmatprep.subr.mxu0 0.0
          %464 = vmatpush1.msra.mxu0 %v381
          %465 = vmatprep.subr.mxu0 0.0
          %466 = vmatpush1.msra.mxu0 0.0
          %467 = vmatprep.subr.mxu0 0.0
          %468 = vmatpush1.msra.mxu0 0.0
          %469 = vmatprep.subr.mxu0 0.0
          %470 = vmatpush1.msra.mxu0 0.0
          %471 = vmatprep.subr.mxu0 0.0
          %472 = vmatpush1.msra.mxu0 0.0
          %473 = vmatprep.subr.mxu0 0.0
          %474 = vmatpush1.msra.mxu0 0.0
          %475 = vmatprep.subr.mxu0 0.0
          %476 = vmatpush1.msra.mxu0 0.0
          %477 = vmatprep.subr.mxu0 0.0
          %478 = vmatpush1.msra.mxu0 0.0
          %479 = vmatprep.subr.mxu0 0.0
          %480 = vmatpush1.msra.mxu0 0.0
          %481 = vmatprep.subr.mxu0 0.0
          %482 = vmatpush1.msra.mxu0 0.0
          %483 = vmatprep.subr.mxu0 0.0
          %484 = vmatpush1.msra.mxu0 0.0
          %485 = vmatprep.subr.mxu0 0.0
          %486 = vmatpush1.msra.mxu0 0.0
          %487 = vmatprep.subr.mxu0 0.0
          %488 = vmatpush1.msra.mxu0 0.0
          %489 = vmatprep.subr.mxu0 0.0
          %490 = vmatpush1.msra.mxu0 0.0
          %491 = vmatprep.subr.mxu0 0.0
          %492 = vmatpush1.msra.mxu0 0.0
          %493 = vmatprep.subr.mxu0 0.0
          %494 = vmatpush1.msra.mxu0 0.0
          %495 = vmatprep.subr.mxu0 0.0
          %496 = vmatpush1.msra.mxu0 0.0
          %497 = vmatprep.subr.mxu0 0.0
          %498 = vmatpush1.msra.mxu0 0.0
          %499 = vmatprep.subr.mxu0 0.0
          %500 = vmatpush1.msra.mxu0 0.0
          %501 = vmatprep.subr.mxu0 0.0
          %502 = vmatpush1.msra.mxu0 0.0
          %503 = vmatprep.subr.mxu0 0.0
          %504 = vmatpush1.msra.mxu0 0.0
          %505 = vmatprep.subr.mxu0 0.0
          %506 = vmatpush1.msra.mxu0 0.0
          %507 = vmatprep.subr.mxu0 0.0
          %508 = vmatpush1.msra.mxu0 0.0
          %509 = vmatprep.subr.mxu0 0.0
          %510 = vmatpush1.msra.mxu0 0.0
          %511 = vmatprep.subr.mxu0 0.0
          %512 = vmatpush1.msra.mxu0 0.0
          %513 = vmatprep.subr.mxu0 0.0
          %514 = vmatpush1.msra.mxu0 0.0
          %515 = vmatprep.subr.mxu0 0.0
          %516 = vmatpush1.msra.mxu0 0.0
          %517 = vmatprep.subr.mxu0 0.0
          %518 = vmatpush1.msra.mxu0 0.0
          %519 = vmatprep.subr.mxu0 0.0
          %520 = vmatpush1.msra.mxu0 0.0
          %521 = vmatprep.subr.mxu0 0.0
          %522 = vmatpush1.msra.mxu0 0.0
          %523 = vmatprep.subr.mxu0 0.0
          %524 = vmatpush1.msra.mxu0 0.0
          %525 = vmatprep.subr.mxu0 0.0
          %526 = vmatpush1.msra.mxu0 0.0
          %527 = vmatprep.mubr.f32.mxu0 0.0
          %528 = vmatmul.mubr.f32.gmra.mrb[0].mxu0 %v416
          %v529 = vpop.f32.mrb[0].mxu0
          %v530 = vadd.f32 0.0, %v529
          %v531 = vpop.f32.mrb[0].mxu0
          %532 = vmatprep.mubr.f32.mxu0 0.0
          %533 = vmatmul.mubr.f32.gmra.mrb[0].mxu0 %v419
          %v534 = vpop.f32.mrb[0].mxu0
          %v535 = vadd.f32 0.0, %v534
          %v536 = vpop.f32.mrb[0].mxu0
          %537 = vmatprep.mubr.f32.mxu0 0.0
          %538 = vmatmul.mubr.f32.gmra.mrb[0].mxu0 %v422
          %v539 = vpop.f32.mrb[0].mxu0
          %v540 = vadd.f32 0.0, %v539
          %v541 = vpop.f32.mrb[0].mxu0
          %542 = vmatprep.mubr.f32.mxu0 0.0
          %543 = vmatmul.mubr.f32.gmra.mrb[0].mxu0 %v425
          %v544 = vpop.f32.mrb[0].mxu0
          %v545 = vadd.f32 0.0, %v544
          %v546 = vpop.f32.mrb[0].mxu0
          %547 = vmatprep.mubr.f32.mxu0 0.0
          %548 = vmatmul.mubr.f32.gmra.mrb[0].mxu0 %v428
          %v549 = vpop.f32.mrb[0].mxu0
          %v550 = vadd.f32 0.0, %v549
          %v551 = vpop.f32.mrb[0].mxu0
          %552 = vmatprep.mubr.f32.mxu0 0.0
          %553 = vmatmul.mubr.f32.gmra.mrb[0].mxu0 %v431
          %v554 = vpop.f32.mrb[0].mxu0
          %v555 = vadd.f32 0.0, %v554
          %v556 = vpop.f32.mrb[0].mxu0
          %557 = vmatprep.mubr.f32.mxu0 0.0
          %558 = vmatmul.mubr.f32.gmra.mrb[0].mxu0 %v434
          %v559 = vpop.f32.mrb[0].mxu0
          %v560 = vadd.f32 0.0, %v559
          %v561 = vpop.f32.mrb[0].mxu0
          %562 = vmatprep.mubr.f32.mxu0 0.0
          %563 = vmatmul.mubr.f32.gmra.mrb[0].mxu0 %v437
          %v564 = vpop.f32.mrb[0].mxu0
          %v565 = vadd.f32 0.0, %v564
          %v566 = vpop.f32.mrb[0].mxu0
          %567 = vmatprep.mubr.f32.mxu0 0.0
          %568 = vmatmul.mubr.f32.gmra.mrb[0].mxu0 %v440
          %v569 = vpop.f32.mrb[0].mxu0
          %v570 = vadd.f32 0.0, %v569
          %v571 = vpop.f32.mrb[0].mxu0
          %572 = vmatprep.mubr.f32.mxu0 0.0
          %573 = vmatmul.mubr.f32.gmra.mrb[0].mxu0 %v443
          %v574 = vpop.f32.mrb[0].mxu0
          %v575 = vadd.f32 0.0, %v574
          %v576 = vpop.f32.mrb[0].mxu0
          %577 = vmatprep.mubr.f32.mxu0 0.0
          %578 = vmatmul.mubr.f32.gmra.mrb[0].mxu0 %v446
          %v579 = vpop.f32.mrb[0].mxu0
          %v580 = vadd.f32 0.0, %v579
          %v581 = vpop.f32.mrb[0].mxu0
          %582 = vmatprep.mubr.f32.mxu0 0.0
          %583 = vmatmul.mubr.f32.gmra.mrb[0].mxu0 %v449
          %v584 = vpop.f32.mrb[0].mxu0
          %v585 = vadd.f32 0.0, %v584
          %v586 = vpop.f32.mrb[0].mxu0
          %587 = vmatprep.mubr.f32.mxu0 0.0
          %588 = vmatmul.mubr.f32.gmra.mrb[0].mxu0 %v452
          %v589 = vpop.f32.mrb[0].mxu0
          %v590 = vadd.f32 0.0, %v589
          %v591 = vpop.f32.mrb[0].mxu0
          %592 = vmatprep.mubr.f32.mxu0 0.0
          %593 = vmatmul.mubr.f32.gmra.mrb[0].mxu0 %v455
          %v594 = vpop.f32.mrb[0].mxu0
          %v595 = vadd.f32 0.0, %v594
          %v596 = vpop.f32.mrb[0].mxu0
          %597 = vmatprep.mubr.f32.mxu0 0.0
          %598 = vmatmul.mubr.f32.gmra.mrb[0].mxu0 %v458
          %v599 = vpop.f32.mrb[0].mxu0
          %v600 = vadd.f32 0.0, %v599
          %v601 = vpop.f32.mrb[0].mxu0
          %602 = vmatprep.mubr.f32.mxu0 0.0
          %603 = vmatmul.mubr.f32.gmra.mrb[0].mxu0 %v461
          %v604 = vpop.f32.mrb[0].mxu0
          %v605 = vadd.f32 0.0, %v604
          %v606 = vpop.f32.mrb[0].mxu0
          %607 = vdwg.mxu0
          %v608 = vmul.f32 %v530, 2.0
          %v609 = vmul.f32 %v535, 2.0
          %v610 = vmul.f32 %v540, 2.0
          %v611 = vmul.f32 %v545, 2.0
          %v612 = vmul.f32 %v550, 2.0
          %v613 = vmul.f32 %v555, 2.0
          %v614 = vmul.f32 %v560, 2.0
          %v615 = vmul.f32 %v565, 2.0
          %v616 = vmul.f32 %v570, 2.0
          %v617 = vmul.f32 %v575, 2.0
          %v618 = vmul.f32 %v580, 2.0
          %v619 = vmul.f32 %v585, 2.0
          %v620 = vmul.f32 %v590, 2.0
          %v621 = vmul.f32 %v595, 2.0
          %v622 = vmul.f32 %v600, 2.0
          %v623 = vmul.f32 %v605, 2.0
          %v624 = vadd.f32 %v365, %v608
          %v625 = vadd.f32 %v366, %v609
          %v626 = vadd.f32 %v367, %v610
          %v627 = vadd.f32 %v368, %v611
          %v628 = vadd.f32 %v369, %v612
          %v629 = vadd.f32 %v370, %v613
          %v630 = vadd.f32 %v371, %v614
          %v631 = vadd.f32 %v372, %v615
          %v632 = vadd.f32 %v373, %v616
          %v633 = vadd.f32 %v374, %v617
          %v634 = vadd.f32 %v375, %v618
          %v635 = vadd.f32 %v376, %v619
          %v636 = vadd.f32 %v377, %v620
          %v637 = vadd.f32 %v378, %v621
          %v638 = vadd.f32 %v379, %v622
          %v639 = vadd.f32 %v380, %v623
          %640 = vmin.xlane.f32.xlu0 %v624
          %v641 = vpop.xlane.xlu0 %640
          %642 = vmin.xlane.f32.xlu0 %v625
          %v643 = vpop.xlane.xlu0 %642
          %644 = vmin.xlane.f32.xlu0 %v626
          %v645 = vpop.xlane.xlu0 %644
          %646 = vmin.xlane.f32.xlu0 %v627
          %v647 = vpop.xlane.xlu0 %646
          %648 = vmin.xlane.f32.xlu0 %v628
          %v649 = vpop.xlane.xlu0 %648
          %650 = vmin.xlane.f32.xlu0 %v629
          %v651 = vpop.xlane.xlu0 %650
          %652 = vmin.xlane.f32.xlu0 %v630
          %v653 = vpop.xlane.xlu0 %652
          %654 = vmin.xlane.f32.xlu0 %v631
          %v655 = vpop.xlane.xlu0 %654
          %656 = vmin.xlane.f32.xlu0 %v632
          %v657 = vpop.xlane.xlu0 %656
          %658 = vmin.xlane.f32.xlu0 %v633
          %v659 = vpop.xlane.xlu0 %658
          %660 = vmin.xlane.f32.xlu0 %v634
          %v661 = vpop.xlane.xlu0 %660
          %662 = vmin.xlane.f32.xlu0 %v635
          %v663 = vpop.xlane.xlu0 %662
          %664 = vmin.xlane.f32.xlu0 %v636
          %v665 = vpop.xlane.xlu0 %664
          %666 = vmin.xlane.f32.xlu0 %v637
          %v667 = vpop.xlane.xlu0 %666
          %668 = vmin.xlane.f32.xlu0 %v638
          %v669 = vpop.xlane.xlu0 %668
          %670 = vmin.xlane.f32.xlu0 %v639
          %v671 = vpop.xlane.xlu0 %670
          %672 = vmax.xlane.f32.xlu0 %v624
          %v673 = vpop.xlane.xlu0 %672
          %674 = vmax.xlane.f32.xlu0 %v625
          %v675 = vpop.xlane.xlu0 %674
          %676 = vmax.xlane.f32.xlu0 %v626
          %v677 = vpop.xlane.xlu0 %676
          %678 = vmax.xlane.f32.xlu0 %v627
          %v679 = vpop.xlane.xlu0 %678
          %680 = vmax.xlane.f32.xlu0 %v628
          %v681 = vpop.xlane.xlu0 %680
          %682 = vmax.xlane.f32.xlu0 %v629
          %v683 = vpop.xlane.xlu0 %682
          %684 = vmax.xlane.f32.xlu0 %v630
          %v685 = vpop.xlane.xlu0 %684
          %686 = vmax.xlane.f32.xlu0 %v631
          %v687 = vpop.xlane.xlu0 %686
          %688 = vmax.xlane.f32.xlu0 %v632
          %v689 = vpop.xlane.xlu0 %688
          %690 = vmax.xlane.f32.xlu0 %v633
          %v691 = vpop.xlane.xlu0 %690
          %692 = vmax.xlane.f32.xlu0 %v634
          %v693 = vpop.xlane.xlu0 %692
          %694 = vmax.xlane.f32.xlu0 %v635
          %v695 = vpop.xlane.xlu0 %694
          %696 = vmax.xlane.f32.xlu0 %v636
          %v697 = vpop.xlane.xlu0 %696
          %698 = vmax.xlane.f32.xlu0 %v637
          %v699 = vpop.xlane.xlu0 %698
          %700 = vmax.xlane.f32.xlu0 %v638
          %v701 = vpop.xlane.xlu0 %700
          %702 = vmax.xlane.f32.xlu0 %v639
          %v703 = vpop.xlane.xlu0 %702
          %v704 = vld [vmem:[%s303 + $0x8] sm:$0xff]
          %v705 = vld [vmem:[%s303 + $0x18] sm:$0xff]
          %v706 = vld [vmem:[%s303 + $0x28] sm:$0xff]
          %v707 = vld [vmem:[%s303 + $0x38] sm:$0xff]
          %v708 = vld [vmem:[%s303 + $0x48] sm:$0xff]
          %v709 = vld [vmem:[%s303 + $0x58] sm:$0xff]
          %v710 = vld [vmem:[%s303 + $0x68] sm:$0xff]
          %v711 = vld [vmem:[%s303 + $0x78] sm:$0xff]
          %v712 = vld [vmem:[%s303 + $0x88] sm:$0xff]
          %v713 = vld [vmem:[%s303 + $0x98] sm:$0xff]
          %v714 = vld [vmem:[%s303 + $0xa8] sm:$0xff]
          %v715 = vld [vmem:[%s303 + $0xb8] sm:$0xff]
          %v716 = vld [vmem:[%s303 + $0xc8] sm:$0xff]
          %v717 = vld [vmem:[%s303 + $0xd8] sm:$0xff]
          %v718 = vld [vmem:[%s303 + $0xe8] sm:$0xff]
          %v719 = vld [vmem:[%s303 + $0xf8] sm:$0xff]
          %v720 = vld [vmem:[#allocation8 + $0x8] sm:$0xff]
          %721 = vmatprep.subr.mxu0 0.0
          %722 = vmatpush1.msra.mxu0 %v720
          %723 = vmatprep.subr.mxu0 0.0
          %724 = vmatpush1.msra.mxu0 0.0
          %725 = vmatprep.subr.mxu0 0.0
          %726 = vmatpush1.msra.mxu0 0.0
          %727 = vmatprep.subr.mxu0 0.0
          %728 = vmatpush1.msra.mxu0 0.0
          %729 = vmatprep.subr.mxu0 0.0
          %730 = vmatpush1.msra.mxu0 0.0
          %731 = vmatprep.subr.mxu0 0.0
          %732 = vmatpush1.msra.mxu0 0.0
          %733 = vmatprep.subr.mxu0 0.0
          %734 = vmatpush1.msra.mxu0 0.0
          %735 = vmatprep.subr.mxu0 0.0
          %736 = vmatpush1.msra.mxu0 0.0
          %737 = vmatprep.subr.mxu0 0.0
          %738 = vmatpush1.msra.mxu0 0.0
          %739 = vmatprep.subr.mxu0 0.0
          %740 = vmatpush1.msra.mxu0 0.0
          %741 = vmatprep.subr.mxu0 0.0
          %742 = vmatpush1.msra.mxu0 0.0
          %743 = vmatprep.subr.mxu0 0.0
          %744 = vmatpush1.msra.mxu0 0.0
          %745 = vmatprep.subr.mxu0 0.0
          %746 = vmatpush1.msra.mxu0 0.0
          %747 = vmatprep.subr.mxu0 0.0
          %748 = vmatpush1.msra.mxu0 0.0
          %749 = vmatprep.subr.mxu0 0.0
          %750 = vmatpush1.msra.mxu0 0.0
          %751 = vmatprep.subr.mxu0 0.0
          %752 = vmatpush1.msra.mxu0 0.0
          %753 = vmatprep.subr.mxu0 0.0
          %754 = vmatpush1.msra.mxu0 0.0
          %755 = vmatprep.subr.mxu0 0.0
          %756 = vmatpush1.msra.mxu0 0.0
          %757 = vmatprep.subr.mxu0 0.0
          %758 = vmatpush1.msra.mxu0 0.0
          %759 = vmatprep.subr.mxu0 0.0
          %760 = vmatpush1.msra.mxu0 0.0
          %761 = vmatprep.subr.mxu0 0.0
          %762 = vmatpush1.msra.mxu0 0.0
          %763 = vmatprep.subr.mxu0 0.0
          %764 = vmatpush1.msra.mxu0 0.0
          %765 = vmatprep.subr.mxu0 0.0
          %766 = vmatpush1.msra.mxu0 0.0
          %767 = vmatprep.subr.mxu0 0.0
          %768 = vmatpush1.msra.mxu0 0.0
          %769 = vmatprep.subr.mxu0 0.0
          %770 = vmatpush1.msra.mxu0 0.0
          %771 = vmatprep.subr.mxu0 0.0
          %772 = vmatpush1.msra.mxu0 0.0
          %773 = vmatprep.subr.mxu0 0.0
          %774 = vmatpush1.msra.mxu0 0.0
          %775 = vmatprep.subr.mxu0 0.0
          %776 = vmatpush1.msra.mxu0 0.0
          %777 = vmatprep.subr.mxu0 0.0
          %778 = vmatpush1.msra.mxu0 0.0
          %779 = vmatprep.subr.mxu0 0.0
          %780 = vmatpush1.msra.mxu0 0.0
          %781 = vmatprep.subr.mxu0 0.0
          %782 = vmatpush1.msra.mxu0 0.0
          %783 = vmatprep.subr.mxu0 0.0
          %784 = vmatpush1.msra.mxu0 0.0
          %785 = vmatprep.mubr.f32.mxu0 0.0
          %786 = vmatmul.mubr.f32.gmra.mrb[0].mxu0 %v416
          %v787 = vpop.f32.mrb[0].mxu0
          %v788 = vadd.f32 0.0, %v787
          %v789 = vpop.f32.mrb[0].mxu0
          %790 = vmatprep.mubr.f32.mxu0 0.0
          %791 = vmatmul.mubr.f32.gmra.mrb[0].mxu0 %v419
          %v792 = vpop.f32.mrb[0].mxu0
          %v793 = vadd.f32 0.0, %v792
          %v794 = vpop.f32.mrb[0].mxu0
          %795 = vmatprep.mubr.f32.mxu0 0.0
          %796 = vmatmul.mubr.f32.gmra.mrb[0].mxu0 %v422
          %v797 = vpop.f32.mrb[0].mxu0
          %v798 = vadd.f32 0.0, %v797
          %v799 = vpop.f32.mrb[0].mxu0
          %800 = vmatprep.mubr.f32.mxu0 0.0
          %801 = vmatmul.mubr.f32.gmra.mrb[0].mxu0 %v425
          %v802 = vpop.f32.mrb[0].mxu0
          %v803 = vadd.f32 0.0, %v802
          %v804 = vpop.f32.mrb[0].mxu0
          %805 = vmatprep.mubr.f32.mxu0 0.0
          %806 = vmatmul.mubr.f32.gmra.mrb[0].mxu0 %v428
          %v807 = vpop.f32.mrb[0].mxu0
          %v808 = vadd.f32 0.0, %v807
          %v809 = vpop.f32.mrb[0].mxu0
          %810 = vmatprep.mubr.f32.mxu0 0.0
          %811 = vmatmul.mubr.f32.gmra.mrb[0].mxu0 %v431
          %v812 = vpop.f32.mrb[0].mxu0
          %v813 = vadd.f32 0.0, %v812
          %v814 = vpop.f32.mrb[0].mxu0
          %815 = vmatprep.mubr.f32.mxu0 0.0
          %816 = vmatmul.mubr.f32.gmra.mrb[0].mxu0 %v434
          %v817 = vpop.f32.mrb[0].mxu0
          %v818 = vadd.f32 0.0, %v817
          %v819 = vpop.f32.mrb[0].mxu0
          %820 = vmatprep.mubr.f32.mxu0 0.0
          %821 = vmatmul.mubr.f32.gmra.mrb[0].mxu0 %v437
          %v822 = vpop.f32.mrb[0].mxu0
          %v823 = vadd.f32 0.0, %v822
          %v824 = vpop.f32.mrb[0].mxu0
          %825 = vmatprep.mubr.f32.mxu0 0.0
          %826 = vmatmul.mubr.f32.gmra.mrb[0].mxu0 %v440
          %v827 = vpop.f32.mrb[0].mxu0
          %v828 = vadd.f32 0.0, %v827
          %v829 = vpop.f32.mrb[0].mxu0
          %830 = vmatprep.mubr.f32.mxu0 0.0
          %831 = vmatmul.mubr.f32.gmra.mrb[0].mxu0 %v443
          %v832 = vpop.f32.mrb[0].mxu0
          %v833 = vadd.f32 0.0, %v832
          %v834 = vpop.f32.mrb[0].mxu0
          %835 = vmatprep.mubr.f32.mxu0 0.0
          %836 = vmatmul.mubr.f32.gmra.mrb[0].mxu0 %v446
          %v837 = vpop.f32.mrb[0].mxu0
          %v838 = vadd.f32 0.0, %v837
          %v839 = vpop.f32.mrb[0].mxu0
          %840 = vmatprep.mubr.f32.mxu0 0.0
          %841 = vmatmul.mubr.f32.gmra.mrb[0].mxu0 %v449
          %v842 = vpop.f32.mrb[0].mxu0
          %v843 = vadd.f32 0.0, %v842
          %v844 = vpop.f32.mrb[0].mxu0
          %845 = vmatprep.mubr.f32.mxu0 0.0
          %846 = vmatmul.mubr.f32.gmra.mrb[0].mxu0 %v452
          %v847 = vpop.f32.mrb[0].mxu0
          %v848 = vadd.f32 0.0, %v847
          %v849 = vpop.f32.mrb[0].mxu0
          %850 = vmatprep.mubr.f32.mxu0 0.0
          %851 = vmatmul.mubr.f32.gmra.mrb[0].mxu0 %v455
          %v852 = vpop.f32.mrb[0].mxu0
          %v853 = vadd.f32 0.0, %v852
          %v854 = vpop.f32.mrb[0].mxu0
          %855 = vmatprep.mubr.f32.mxu0 0.0
          %856 = vmatmul.mubr.f32.gmra.mrb[0].mxu0 %v458
          %v857 = vpop.f32.mrb[0].mxu0
          %v858 = vadd.f32 0.0, %v857
          %v859 = vpop.f32.mrb[0].mxu0
          %860 = vmatprep.mubr.f32.mxu0 0.0
          %861 = vmatmul.mubr.f32.gmra.mrb[0].mxu0 %v461
          %v862 = vpop.f32.mrb[0].mxu0
          %v863 = vadd.f32 0.0, %v862
          %v864 = vpop.f32.mrb[0].mxu0
          %865 = vdwg.mxu0
          %v866 = vmul.f32 %v788, 2.0
          %v867 = vmul.f32 %v793, 2.0
          %v868 = vmul.f32 %v798, 2.0
          %v869 = vmul.f32 %v803, 2.0
          %v870 = vmul.f32 %v808, 2.0
          %v871 = vmul.f32 %v813, 2.0
          %v872 = vmul.f32 %v818, 2.0
          %v873 = vmul.f32 %v823, 2.0
          %v874 = vmul.f32 %v828, 2.0
          %v875 = vmul.f32 %v833, 2.0
          %v876 = vmul.f32 %v838, 2.0
          %v877 = vmul.f32 %v843, 2.0
          %v878 = vmul.f32 %v848, 2.0
          %v879 = vmul.f32 %v853, 2.0
          %v880 = vmul.f32 %v858, 2.0
          %v881 = vmul.f32 %v863, 2.0
          %v882 = vadd.f32 %v704, %v866
          %v883 = vadd.f32 %v705, %v867
          %v884 = vadd.f32 %v706, %v868
          %v885 = vadd.f32 %v707, %v869
          %v886 = vadd.f32 %v708, %v870
          %v887 = vadd.f32 %v709, %v871
          %v888 = vadd.f32 %v710, %v872
          %v889 = vadd.f32 %v711, %v873
          %v890 = vadd.f32 %v712, %v874
          %v891 = vadd.f32 %v713, %v875
          %v892 = vadd.f32 %v714, %v876
          %v893 = vadd.f32 %v715, %v877
          %v894 = vadd.f32 %v716, %v878
          %v895 = vadd.f32 %v717, %v879
          %v896 = vadd.f32 %v718, %v880
          %v897 = vadd.f32 %v719, %v881
          %898 = vmin.xlane.f32.xlu0 %v882
          %v899 = vpop.xlane.xlu0 %898
          %900 = vmin.xlane.f32.xlu0 %v883
          %v901 = vpop.xlane.xlu0 %900
          %902 = vmin.xlane.f32.xlu0 %v884
          %v903 = vpop.xlane.xlu0 %902
          %904 = vmin.xlane.f32.xlu0 %v885
          %v905 = vpop.xlane.xlu0 %904
          %906 = vmin.xlane.f32.xlu0 %v886
          %v907 = vpop.xlane.xlu0 %906
          %908 = vmin.xlane.f32.xlu0 %v887
          %v909 = vpop.xlane.xlu0 %908
          %910 = vmin.xlane.f32.xlu0 %v888
          %v911 = vpop.xlane.xlu0 %910
          %912 = vmin.xlane.f32.xlu0 %v889
          %v913 = vpop.xlane.xlu0 %912
          %914 = vmin.xlane.f32.xlu0 %v890
          %v915 = vpop.xlane.xlu0 %914
          %916 = vmin.xlane.f32.xlu0 %v891
          %v917 = vpop.xlane.xlu0 %916
          %918 = vmin.xlane.f32.xlu0 %v892
          %v919 = vpop.xlane.xlu0 %918
          %920 = vmin.xlane.f32.xlu0 %v893
          %v921 = vpop.xlane.xlu0 %920
          %922 = vmin.xlane.f32.xlu0 %v894
          %v923 = vpop.xlane.xlu0 %922
          %924 = vmin.xlane.f32.xlu0 %v895
          %v925 = vpop.xlane.xlu0 %924
          %926 = vmin.xlane.f32.xlu0 %v896
          %v927 = vpop.xlane.xlu0 %926
          %928 = vmin.xlane.f32.xlu0 %v897
          %v929 = vpop.xlane.xlu0 %928
          %930 = vmax.xlane.f32.xlu0 %v882
          %v931 = vpop.xlane.xlu0 %930
          %932 = vmax.xlane.f32.xlu0 %v883
          %v933 = vpop.xlane.xlu0 %932
          %934 = vmax.xlane.f32.xlu0 %v884
          %v935 = vpop.xlane.xlu0 %934
          %936 = vmax.xlane.f32.xlu0 %v885
          %v937 = vpop.xlane.xlu0 %936
          %938 = vmax.xlane.f32.xlu0 %v886
          %v939 = vpop.xlane.xlu0 %938
          %940 = vmax.xlane.f32.xlu0 %v887
          %v941 = vpop.xlane.xlu0 %940
          %942 = vmax.xlane.f32.xlu0 %v888
          %v943 = vpop.xlane.xlu0 %942
          %944 = vmax.xlane.f32.xlu0 %v889
          %v945 = vpop.xlane.xlu0 %944
          %946 = vmax.xlane.f32.xlu0 %v890
          %v947 = vpop.xlane.xlu0 %946
          %948 = vmax.xlane.f32.xlu0 %v891
          %v949 = vpop.xlane.xlu0 %948
          %950 = vmax.xlane.f32.xlu0 %v892
          %v951 = vpop.xlane.xlu0 %950
          %952 = vmax.xlane.f32.xlu0 %v893
          %v953 = vpop.xlane.xlu0 %952
          %954 = vmax.xlane.f32.xlu0 %v894
          %v955 = vpop.xlane.xlu0 %954
          %956 = vmax.xlane.f32.xlu0 %v895
          %v957 = vpop.xlane.xlu0 %956
          %958 = vmax.xlane.f32.xlu0 %v896
          %v959 = vpop.xlane.xlu0 %958
          %960 = vmax.xlane.f32.xlu0 %v897
          %v961 = vpop.xlane.xlu0 %960
          %v962 = vmin.f32 %v641, %v899
          %v963 = vmin.f32 %v643, %v901
          %v964 = vmin.f32 %v645, %v903
          %v965 = vmin.f32 %v647, %v905
          %v966 = vmin.f32 %v649, %v907
          %v967 = vmin.f32 %v651, %v909
          %v968 = vmin.f32 %v653, %v911
          %v969 = vmin.f32 %v655, %v913
          %v970 = vmin.f32 %v657, %v915
          %v971 = vmin.f32 %v659, %v917
          %v972 = vmin.f32 %v661, %v919
          %v973 = vmin.f32 %v663, %v921
          %v974 = vmin.f32 %v665, %v923
          %v975 = vmin.f32 %v667, %v925
          %v976 = vmin.f32 %v669, %v927
          %v977 = vmin.f32 %v671, %v929
          %v978 = vmax.f32 %v673, %v931
          %v979 = vmax.f32 %v675, %v933
          %v980 = vmax.f32 %v677, %v935
          %v981 = vmax.f32 %v679, %v937
          %v982 = vmax.f32 %v681, %v939
          %v983 = vmax.f32 %v683, %v941
          %v984 = vmax.f32 %v685, %v943
          %v985 = vmax.f32 %v687, %v945
          %v986 = vmax.f32 %v689, %v947
          %v987 = vmax.f32 %v691, %v949
          %v988 = vmax.f32 %v693, %v951
          %v989 = vmax.f32 %v695, %v953
          %v990 = vmax.f32 %v697, %v955
          %v991 = vmax.f32 %v699, %v957
          %v992 = vmax.f32 %v701, %v959
          %v993 = vmax.f32 %v703, %v961
          %v994 = vsub.f32 %v978, %v962
          %v995 = vsub.f32 %v979, %v963
          %v996 = vsub.f32 %v980, %v964
          %v997 = vsub.f32 %v981, %v965
          %v998 = vsub.f32 %v982, %v966
          %v999 = vsub.f32 %v983, %v967
          %v1000 = vsub.f32 %v984, %v968
          %v1001 = vsub.f32 %v985, %v969
          %v1002 = vsub.f32 %v986, %v970
          %v1003 = vsub.f32 %v987, %v971
          %v1004 = vsub.f32 %v988, %v972
          %v1005 = vsub.f32 %v989, %v973
          %v1006 = vsub.f32 %v990, %v974
          %v1007 = vsub.f32 %v991, %v975
          %v1008 = vsub.f32 %v992, %v976
          %v1009 = vsub.f32 %v993, %v977
          %v1010 = vrcp.pop %v994
          %v1011 = vmul.f32 255.0, %v1010
          %v1012 = vrcp.pop %v995
          %v1013 = vmul.f32 255.0, %v1012
          %v1014 = vrcp.pop %v996
          %v1015 = vmul.f32 255.0, %v1014
          %v1016 = vrcp.pop %v997
          %v1017 = vmul.f32 255.0, %v1016
          %v1018 = vrcp.pop %v998
          %v1019 = vmul.f32 255.0, %v1018
          %v1020 = vrcp.pop %v999
          %v1021 = vmul.f32 255.0, %v1020
          %v1022 = vrcp.pop %v1000
          %v1023 = vmul.f32 255.0, %v1022
          %v1024 = vrcp.pop %v1001
          %v1025 = vmul.f32 255.0, %v1024
          %v1026 = vrcp.pop %v1002
          %v1027 = vmul.f32 255.0, %v1026
          %v1028 = vrcp.pop %v1003
          %v1029 = vmul.f32 255.0, %v1028
          %v1030 = vrcp.pop %v1004
          %v1031 = vmul.f32 255.0, %v1030
          %v1032 = vrcp.pop %v1005
          %v1033 = vmul.f32 255.0, %v1032
          %v1034 = vrcp.pop %v1006
          %v1035 = vmul.f32 255.0, %v1034
          %v1036 = vrcp.pop %v1007
          %v1037 = vmul.f32 255.0, %v1036
          %v1038 = vrcp.pop %v1008
          %v1039 = vmul.f32 255.0, %v1038
          %v1040 = vrcp.pop %v1009
          %v1041 = vmul.f32 255.0, %v1040
          %v1042 = vmin.f32 %v1011, 20000.0
          %v1043 = vmin.f32 %v1013, 20000.0
          %v1044 = vmin.f32 %v1015, 20000.0
          %v1045 = vmin.f32 %v1017, 20000.0
          %v1046 = vmin.f32 %v1019, 20000.0
          %v1047 = vmin.f32 %v1021, 20000.0
          %v1048 = vmin.f32 %v1023, 20000.0
          %v1049 = vmin.f32 %v1025, 20000.0
          %v1050 = vmin.f32 %v1027, 20000.0
          %v1051 = vmin.f32 %v1029, 20000.0
          %v1052 = vmin.f32 %v1031, 20000.0
          %v1053 = vmin.f32 %v1033, 20000.0
          %v1054 = vmin.f32 %v1035, 20000.0
          %v1055 = vmin.f32 %v1037, 20000.0
          %v1056 = vmin.f32 %v1039, 20000.0
          %v1057 = vmin.f32 %v1041, 20000.0
          %v1058 = vsub.f32 0.0, %v962
          %v1059 = vsub.f32 0.0, %v963
          %v1060 = vsub.f32 0.0, %v964
          %v1061 = vsub.f32 0.0, %v965
          %v1062 = vsub.f32 0.0, %v966
          %v1063 = vsub.f32 0.0, %v967
          %v1064 = vsub.f32 0.0, %v968
          %v1065 = vsub.f32 0.0, %v969
          %v1066 = vsub.f32 0.0, %v970
          %v1067 = vsub.f32 0.0, %v971
          %v1068 = vsub.f32 0.0, %v972
          %v1069 = vsub.f32 0.0, %v973
          %v1070 = vsub.f32 0.0, %v974
          %v1071 = vsub.f32 0.0, %v975
          %v1072 = vsub.f32 0.0, %v976
          %v1073 = vsub.f32 0.0, %v977
          %v1074 = vmul.f32 %v1058, %v1042
          %v1075 = vmul.f32 %v1059, %v1043
          %v1076 = vmul.f32 %v1060, %v1044
          %v1077 = vmul.f32 %v1061, %v1045
          %v1078 = vmul.f32 %v1062, %v1046
          %v1079 = vmul.f32 %v1063, %v1047
          %v1080 = vmul.f32 %v1064, %v1048
          %v1081 = vmul.f32 %v1065, %v1049
          %v1082 = vmul.f32 %v1066, %v1050
          %v1083 = vmul.f32 %v1067, %v1051
          %v1084 = vmul.f32 %v1068, %v1052
          %v1085 = vmul.f32 %v1069, %v1053
          %v1086 = vmul.f32 %v1070, %v1054
          %v1087 = vmul.f32 %v1071, %v1055
          %v1088 = vmul.f32 %v1072, %v1056
          %v1089 = vmul.f32 %v1073, %v1057
          %v1090 = vrcp.pop %v1042
          %v1091 = vmul.f32 1.0, %v1090
          %v1092 = vrcp.pop %v1043
          %v1093 = vmul.f32 1.0, %v1092
          %v1094 = vrcp.pop %v1044
          %v1095 = vmul.f32 1.0, %v1094
          %v1096 = vrcp.pop %v1045
          %v1097 = vmul.f32 1.0, %v1096
          %v1098 = vrcp.pop %v1046
          %v1099 = vmul.f32 1.0, %v1098
          %v1100 = vrcp.pop %v1047
          %v1101 = vmul.f32 1.0, %v1100
          %v1102 = vrcp.pop %v1048
          %v1103 = vmul.f32 1.0, %v1102
          %v1104 = vrcp.pop %v1049
          %v1105 = vmul.f32 1.0, %v1104
          %v1106 = vrcp.pop %v1050
          %v1107 = vmul.f32 1.0, %v1106
          %v1108 = vrcp.pop %v1051
          %v1109 = vmul.f32 1.0, %v1108
          %v1110 = vrcp.pop %v1052
          %v1111 = vmul.f32 1.0, %v1110
          %v1112 = vrcp.pop %v1053
          %v1113 = vmul.f32 1.0, %v1112
          %v1114 = vrcp.pop %v1054
          %v1115 = vmul.f32 1.0, %v1114
          %v1116 = vrcp.pop %v1055
          %v1117 = vmul.f32 1.0, %v1116
          %v1118 = vrcp.pop %v1056
          %v1119 = vmul.f32 1.0, %v1118
          %v1120 = vrcp.pop %v1057
          %v1121 = vmul.f32 1.0, %v1120
          %v1122 = vmul.f32 %v624, %v1042
          %v1123 = vmul.f32 %v625, %v1043
          %v1124 = vmul.f32 %v626, %v1044
          %v1125 = vmul.f32 %v627, %v1045
          %v1126 = vmul.f32 %v628, %v1046
          %v1127 = vmul.f32 %v629, %v1047
          %v1128 = vmul.f32 %v630, %v1048
          %v1129 = vmul.f32 %v631, %v1049
          %v1130 = vmul.f32 %v632, %v1050
          %v1131 = vmul.f32 %v633, %v1051
          %v1132 = vmul.f32 %v634, %v1052
          %v1133 = vmul.f32 %v635, %v1053
          %v1134 = vmul.f32 %v636, %v1054
          %v1135 = vmul.f32 %v637, %v1055
          %v1136 = vmul.f32 %v638, %v1056
          %v1137 = vmul.f32 %v639, %v1057
          %v1138 = vadd.f32 %v1122, %v1074
          %v1139 = vadd.f32 %v1123, %v1075
          %v1140 = vadd.f32 %v1124, %v1076
          %v1141 = vadd.f32 %v1125, %v1077
          %v1142 = vadd.f32 %v1126, %v1078
          %v1143 = vadd.f32 %v1127, %v1079
          %v1144 = vadd.f32 %v1128, %v1080
          %v1145 = vadd.f32 %v1129, %v1081
          %v1146 = vadd.f32 %v1130, %v1082
          %v1147 = vadd.f32 %v1131, %v1083
          %v1148 = vadd.f32 %v1132, %v1084
          %v1149 = vadd.f32 %v1133, %v1085
          %v1150 = vadd.f32 %v1134, %v1086
          %v1151 = vadd.f32 %v1135, %v1087
          %v1152 = vadd.f32 %v1136, %v1088
          %v1153 = vadd.f32 %v1137, %v1089
          %v1154 = vround.ne.pseudo %v1138
          %v1155 = vround.ne.pseudo %v1139
          %v1156 = vround.ne.pseudo %v1140
          %v1157 = vround.ne.pseudo %v1141
          %v1158 = vround.ne.pseudo %v1142
          %v1159 = vround.ne.pseudo %v1143
          %v1160 = vround.ne.pseudo %v1144
          %v1161 = vround.ne.pseudo %v1145
          %v1162 = vround.ne.pseudo %v1146
          %v1163 = vround.ne.pseudo %v1147
          %v1164 = vround.ne.pseudo %v1148
          %v1165 = vround.ne.pseudo %v1149
          %v1166 = vround.ne.pseudo %v1150
          %v1167 = vround.ne.pseudo %v1151
          %v1168 = vround.ne.pseudo %v1152
          %v1169 = vround.ne.pseudo %v1153
          %v1170 = vmax.f32 %v1154, 0.0
          %v1171 = vmax.f32 %v1155, 0.0
          %v1172 = vmax.f32 %v1156, 0.0
          %v1173 = vmax.f32 %v1157, 0.0
          %v1174 = vmax.f32 %v1158, 0.0
          %v1175 = vmax.f32 %v1159, 0.0
          %v1176 = vmax.f32 %v1160, 0.0
          %v1177 = vmax.f32 %v1161, 0.0
          %v1178 = vmax.f32 %v1162, 0.0
          %v1179 = vmax.f32 %v1163, 0.0
          %v1180 = vmax.f32 %v1164, 0.0
          %v1181 = vmax.f32 %v1165, 0.0
          %v1182 = vmax.f32 %v1166, 0.0
          %v1183 = vmax.f32 %v1167, 0.0
          %v1184 = vmax.f32 %v1168, 0.0
          %v1185 = vmax.f32 %v1169, 0.0
          %v1186 = vmin.f32 %v1170, 255.0
          %v1187 = vmin.f32 %v1171, 255.0
          %v1188 = vmin.f32 %v1172, 255.0
          %v1189 = vmin.f32 %v1173, 255.0
          %v1190 = vmin.f32 %v1174, 255.0
          %v1191 = vmin.f32 %v1175, 255.0
          %v1192 = vmin.f32 %v1176, 255.0
          %v1193 = vmin.f32 %v1177, 255.0
          %v1194 = vmin.f32 %v1178, 255.0
          %v1195 = vmin.f32 %v1179, 255.0
          %v1196 = vmin.f32 %v1180, 255.0
          %v1197 = vmin.f32 %v1181, 255.0
          %v1198 = vmin.f32 %v1182, 255.0
          %v1199 = vmin.f32 %v1183, 255.0
          %v1200 = vmin.f32 %v1184, 255.0
          %v1201 = vmin.f32 %v1185, 255.0
          %v1202 = vsub.f32 %v1186, %v1074
          %v1203 = vsub.f32 %v1187, %v1075
          %v1204 = vsub.f32 %v1188, %v1076
          %v1205 = vsub.f32 %v1189, %v1077
          %v1206 = vsub.f32 %v1190, %v1078
          %v1207 = vsub.f32 %v1191, %v1079
          %v1208 = vsub.f32 %v1192, %v1080
          %v1209 = vsub.f32 %v1193, %v1081
          %v1210 = vsub.f32 %v1194, %v1082
          %v1211 = vsub.f32 %v1195, %v1083
          %v1212 = vsub.f32 %v1196, %v1084
          %v1213 = vsub.f32 %v1197, %v1085
          %v1214 = vsub.f32 %v1198, %v1086
          %v1215 = vsub.f32 %v1199, %v1087
          %v1216 = vsub.f32 %v1200, %v1088
          %v1217 = vsub.f32 %v1201, %v1089
          %v1218 = vmul.f32 %v1202, %v1091
          %v1219 = vmul.f32 %v1203, %v1093
          %v1220 = vmul.f32 %v1204, %v1095
          %v1221 = vmul.f32 %v1205, %v1097
          %v1222 = vmul.f32 %v1206, %v1099
          %v1223 = vmul.f32 %v1207, %v1101
          %v1224 = vmul.f32 %v1208, %v1103
          %v1225 = vmul.f32 %v1209, %v1105
          %v1226 = vmul.f32 %v1210, %v1107
          %v1227 = vmul.f32 %v1211, %v1109
          %v1228 = vmul.f32 %v1212, %v1111
          %v1229 = vmul.f32 %v1213, %v1113
          %v1230 = vmul.f32 %v1214, %v1115
          %v1231 = vmul.f32 %v1215, %v1117
          %v1232 = vmul.f32 %v1216, %v1119
          %v1233 = vmul.f32 %v1217, %v1121
          %1234 = vst [vmem:[#allocation2] sm:$0xff] %v1218
          %1235 = vst [vmem:[#allocation2 + $0x10] sm:$0xff] %v1219
          %1236 = vst [vmem:[#allocation2 + $0x20] sm:$0xff] %v1220
          %1237 = vst [vmem:[#allocation2 + $0x30] sm:$0xff] %v1221
          %1238 = vst [vmem:[#allocation2 + $0x40] sm:$0xff] %v1222
          %1239 = vst [vmem:[#allocation2 + $0x50] sm:$0xff] %v1223
          %1240 = vst [vmem:[#allocation2 + $0x60] sm:$0xff] %v1224
          %1241 = vst [vmem:[#allocation2 + $0x70] sm:$0xff] %v1225
          %1242 = vst [vmem:[#allocation2 + $0x80] sm:$0xff] %v1226
          %1243 = vst [vmem:[#allocation2 + $0x90] sm:$0xff] %v1227
          %1244 = vst [vmem:[#allocation2 + $0xa0] sm:$0xff] %v1228
          %1245 = vst [vmem:[#allocation2 + $0xb0] sm:$0xff] %v1229
          %1246 = vst [vmem:[#allocation2 + $0xc0] sm:$0xff] %v1230
          %1247 = vst [vmem:[#allocation2 + $0xd0] sm:$0xff] %v1231
          %1248 = vst [vmem:[#allocation2 + $0xe0] sm:$0xff] %v1232
          %1249 = vst [vmem:[#allocation2 + $0xf0] sm:$0xff] %v1233
          %v1250 = vld [vmem:[%s303 + $0x8] sm:$0xff]
          %v1251 = vld [vmem:[%s303 + $0x18] sm:$0xff]
          %v1252 = vld [vmem:[%s303 + $0x28] sm:$0xff]
          %v1253 = vld [vmem:[%s303 + $0x38] sm:$0xff]
          %v1254 = vld [vmem:[%s303 + $0x48] sm:$0xff]
          %v1255 = vld [vmem:[%s303 + $0x58] sm:$0xff]
          %v1256 = vld [vmem:[%s303 + $0x68] sm:$0xff]
          %v1257 = vld [vmem:[%s303 + $0x78] sm:$0xff]
          %v1258 = vld [vmem:[%s303 + $0x88] sm:$0xff]
          %v1259 = vld [vmem:[%s303 + $0x98] sm:$0xff]
          %v1260 = vld [vmem:[%s303 + $0xa8] sm:$0xff]
          %v1261 = vld [vmem:[%s303 + $0xb8] sm:$0xff]
          %v1262 = vld [vmem:[%s303 + $0xc8] sm:$0xff]
          %v1263 = vld [vmem:[%s303 + $0xd8] sm:$0xff]
          %v1264 = vld [vmem:[%s303 + $0xe8] sm:$0xff]
          %v1265 = vld [vmem:[%s303 + $0xf8] sm:$0xff]
          %v1266 = vld [vmem:[#allocation8 + $0x8] sm:$0xff]
          %1267 = vmatprep.subr.mxu0 0.0
          %1268 = vmatpush1.msra.mxu0 %v1266
          %1269 = vmatprep.subr.mxu0 0.0
          %1270 = vmatpush1.msra.mxu0 0.0
          %1271 = vmatprep.subr.mxu0 0.0
          %1272 = vmatpush1.msra.mxu0 0.0
          %1273 = vmatprep.subr.mxu0 0.0
          %1274 = vmatpush1.msra.mxu0 0.0
          %1275 = vmatprep.subr.mxu0 0.0
          %1276 = vmatpush1.msra.mxu0 0.0
          %1277 = vmatprep.subr.mxu0 0.0
          %1278 = vmatpush1.msra.mxu0 0.0
          %1279 = vmatprep.subr.mxu0 0.0
          %1280 = vmatpush1.msra.mxu0 0.0
          %1281 = vmatprep.subr.mxu0 0.0
          %1282 = vmatpush1.msra.mxu0 0.0
          %1283 = vmatprep.subr.mxu0 0.0
          %1284 = vmatpush1.msra.mxu0 0.0
          %1285 = vmatprep.subr.mxu0 0.0
          %1286 = vmatpush1.msra.mxu0 0.0
          %1287 = vmatprep.subr.mxu0 0.0
          %1288 = vmatpush1.msra.mxu0 0.0
          %1289 = vmatprep.subr.mxu0 0.0
          %1290 = vmatpush1.msra.mxu0 0.0
          %1291 = vmatprep.subr.mxu0 0.0
          %1292 = vmatpush1.msra.mxu0 0.0
          %1293 = vmatprep.subr.mxu0 0.0
          %1294 = vmatpush1.msra.mxu0 0.0
          %1295 = vmatprep.subr.mxu0 0.0
          %1296 = vmatpush1.msra.mxu0 0.0
          %1297 = vmatprep.subr.mxu0 0.0
          %1298 = vmatpush1.msra.mxu0 0.0
          %1299 = vmatprep.subr.mxu0 0.0
          %1300 = vmatpush1.msra.mxu0 0.0
          %1301 = vmatprep.subr.mxu0 0.0
          %1302 = vmatpush1.msra.mxu0 0.0
          %1303 = vmatprep.subr.mxu0 0.0
          %1304 = vmatpush1.msra.mxu0 0.0
          %1305 = vmatprep.subr.mxu0 0.0
          %1306 = vmatpush1.msra.mxu0 0.0
          %1307 = vmatprep.subr.mxu0 0.0
          %1308 = vmatpush1.msra.mxu0 0.0
          %1309 = vmatprep.subr.mxu0 0.0
          %1310 = vmatpush1.msra.mxu0 0.0
          %1311 = vmatprep.subr.mxu0 0.0
          %1312 = vmatpush1.msra.mxu0 0.0
          %1313 = vmatprep.subr.mxu0 0.0
          %1314 = vmatpush1.msra.mxu0 0.0
          %1315 = vmatprep.subr.mxu0 0.0
          %1316 = vmatpush1.msra.mxu0 0.0
          %1317 = vmatprep.subr.mxu0 0.0
          %1318 = vmatpush1.msra.mxu0 0.0
          %1319 = vmatprep.subr.mxu0 0.0
          %1320 = vmatpush1.msra.mxu0 0.0
          %1321 = vmatprep.subr.mxu0 0.0
          %1322 = vmatpush1.msra.mxu0 0.0
          %1323 = vmatprep.subr.mxu0 0.0
          %1324 = vmatpush1.msra.mxu0 0.0
          %1325 = vmatprep.subr.mxu0 0.0
          %1326 = vmatpush1.msra.mxu0 0.0
          %1327 = vmatprep.subr.mxu0 0.0
          %1328 = vmatpush1.msra.mxu0 0.0
          %1329 = vmatprep.subr.mxu0 0.0
          %1330 = vmatpush1.msra.mxu0 0.0
          %1331 = vmatprep.mubr.f32.mxu0 0.0
          %1332 = vmatmul.mubr.f32.gmra.mrb[0].mxu0 %v416
          %v1333 = vpop.f32.mrb[0].mxu0
          %v1334 = vadd.f32 0.0, %v1333
          %v1335 = vpop.f32.mrb[0].mxu0
          %1336 = vmatprep.mubr.f32.mxu0 0.0
          %1337 = vmatmul.mubr.f32.gmra.mrb[0].mxu0 %v419
          %v1338 = vpop.f32.mrb[0].mxu0
          %v1339 = vadd.f32 0.0, %v1338
          %v1340 = vpop.f32.mrb[0].mxu0
          %1341 = vmatprep.mubr.f32.mxu0 0.0
          %1342 = vmatmul.mubr.f32.gmra.mrb[0].mxu0 %v422
          %v1343 = vpop.f32.mrb[0].mxu0
          %v1344 = vadd.f32 0.0, %v1343
          %v1345 = vpop.f32.mrb[0].mxu0
          %1346 = vmatprep.mubr.f32.mxu0 0.0
          %1347 = vmatmul.mubr.f32.gmra.mrb[0].mxu0 %v425
          %v1348 = vpop.f32.mrb[0].mxu0
          %v1349 = vadd.f32 0.0, %v1348
          %v1350 = vpop.f32.mrb[0].mxu0
          %1351 = vmatprep.mubr.f32.mxu0 0.0
          %1352 = vmatmul.mubr.f32.gmra.mrb[0].mxu0 %v428
          %v1353 = vpop.f32.mrb[0].mxu0
          %v1354 = vadd.f32 0.0, %v1353
          %v1355 = vpop.f32.mrb[0].mxu0
          %1356 = vmatprep.mubr.f32.mxu0 0.0
          %1357 = vmatmul.mubr.f32.gmra.mrb[0].mxu0 %v431
          %v1358 = vpop.f32.mrb[0].mxu0
          %v1359 = vadd.f32 0.0, %v1358
          %v1360 = vpop.f32.mrb[0].mxu0
          %1361 = vmatprep.mubr.f32.mxu0 0.0
          %1362 = vmatmul.mubr.f32.gmra.mrb[0].mxu0 %v434
          %v1363 = vpop.f32.mrb[0].mxu0
          %v1364 = vadd.f32 0.0, %v1363
          %v1365 = vpop.f32.mrb[0].mxu0
          %1366 = vmatprep.mubr.f32.mxu0 0.0
          %1367 = vmatmul.mubr.f32.gmra.mrb[0].mxu0 %v437
          %v1368 = vpop.f32.mrb[0].mxu0
          %v1369 = vadd.f32 0.0, %v1368
          %v1370 = vpop.f32.mrb[0].mxu0
          %1371 = vmatprep.mubr.f32.mxu0 0.0
          %1372 = vmatmul.mubr.f32.gmra.mrb[0].mxu0 %v440
          %v1373 = vpop.f32.mrb[0].mxu0
          %v1374 = vadd.f32 0.0, %v1373
          %v1375 = vpop.f32.mrb[0].mxu0
          %1376 = vmatprep.mubr.f32.mxu0 0.0
          %1377 = vmatmul.mubr.f32.gmra.mrb[0].mxu0 %v443
          %v1378 = vpop.f32.mrb[0].mxu0
          %v1379 = vadd.f32 0.0, %v1378
          %v1380 = vpop.f32.mrb[0].mxu0
          %1381 = vmatprep.mubr.f32.mxu0 0.0
          %1382 = vmatmul.mubr.f32.gmra.mrb[0].mxu0 %v446
          %v1383 = vpop.f32.mrb[0].mxu0
          %v1384 = vadd.f32 0.0, %v1383
          %v1385 = vpop.f32.mrb[0].mxu0
          %1386 = vmatprep.mubr.f32.mxu0 0.0
          %1387 = vmatmul.mubr.f32.gmra.mrb[0].mxu0 %v449
          %v1388 = vpop.f32.mrb[0].mxu0
          %v1389 = vadd.f32 0.0, %v1388
          %v1390 = vpop.f32.mrb[0].mxu0
          %1391 = vmatprep.mubr.f32.mxu0 0.0
          %1392 = vmatmul.mubr.f32.gmra.mrb[0].mxu0 %v452
          %v1393 = vpop.f32.mrb[0].mxu0
          %v1394 = vadd.f32 0.0, %v1393
          %v1395 = vpop.f32.mrb[0].mxu0
          %1396 = vmatprep.mubr.f32.mxu0 0.0
          %1397 = vmatmul.mubr.f32.gmra.mrb[0].mxu0 %v455
          %v1398 = vpop.f32.mrb[0].mxu0
          %v1399 = vadd.f32 0.0, %v1398
          %v1400 = vpop.f32.mrb[0].mxu0
          %1401 = vmatprep.mubr.f32.mxu0 0.0
          %1402 = vmatmul.mubr.f32.gmra.mrb[0].mxu0 %v458
          %v1403 = vpop.f32.mrb[0].mxu0
          %v1404 = vadd.f32 0.0, %v1403
          %v1405 = vpop.f32.mrb[0].mxu0
          %1406 = vmatprep.mubr.f32.mxu0 0.0
          %1407 = vmatmul.mubr.f32.gmra.mrb[0].mxu0 %v461
          %v1408 = vpop.f32.mrb[0].mxu0
          %v1409 = vadd.f32 0.0, %v1408
          %v1410 = vpop.f32.mrb[0].mxu0
          %1411 = vdwg.mxu0
          %v1412 = vmul.f32 %v1334, 2.0
          %v1413 = vmul.f32 %v1339, 2.0
          %v1414 = vmul.f32 %v1344, 2.0
          %v1415 = vmul.f32 %v1349, 2.0
          %v1416 = vmul.f32 %v1354, 2.0
          %v1417 = vmul.f32 %v1359, 2.0
          %v1418 = vmul.f32 %v1364, 2.0
          %v1419 = vmul.f32 %v1369, 2.0
          %v1420 = vmul.f32 %v1374, 2.0
          %v1421 = vmul.f32 %v1379, 2.0
          %v1422 = vmul.f32 %v1384, 2.0
          %v1423 = vmul.f32 %v1389, 2.0
          %v1424 = vmul.f32 %v1394, 2.0
          %v1425 = vmul.f32 %v1399, 2.0
          %v1426 = vmul.f32 %v1404, 2.0
          %v1427 = vmul.f32 %v1409, 2.0
          %v1428 = vadd.f32 %v1250, %v1412
          %v1429 = vadd.f32 %v1251, %v1413
          %v1430 = vadd.f32 %v1252, %v1414
          %v1431 = vadd.f32 %v1253, %v1415
          %v1432 = vadd.f32 %v1254, %v1416
          %v1433 = vadd.f32 %v1255, %v1417
          %v1434 = vadd.f32 %v1256, %v1418
          %v1435 = vadd.f32 %v1257, %v1419
          %v1436 = vadd.f32 %v1258, %v1420
          %v1437 = vadd.f32 %v1259, %v1421
          %v1438 = vadd.f32 %v1260, %v1422
          %v1439 = vadd.f32 %v1261, %v1423
          %v1440 = vadd.f32 %v1262, %v1424
          %v1441 = vadd.f32 %v1263, %v1425
          %v1442 = vadd.f32 %v1264, %v1426
          %v1443 = vadd.f32 %v1265, %v1427
          %v1444 = vmul.f32 %v1428, %v1042
          %v1445 = vmul.f32 %v1429, %v1043
          %v1446 = vmul.f32 %v1430, %v1044
          %v1447 = vmul.f32 %v1431, %v1045
          %v1448 = vmul.f32 %v1432, %v1046
          %v1449 = vmul.f32 %v1433, %v1047
          %v1450 = vmul.f32 %v1434, %v1048
          %v1451 = vmul.f32 %v1435, %v1049
          %v1452 = vmul.f32 %v1436, %v1050
          %v1453 = vmul.f32 %v1437, %v1051
          %v1454 = vmul.f32 %v1438, %v1052
          %v1455 = vmul.f32 %v1439, %v1053
          %v1456 = vmul.f32 %v1440, %v1054
          %v1457 = vmul.f32 %v1441, %v1055
          %v1458 = vmul.f32 %v1442, %v1056
          %v1459 = vmul.f32 %v1443, %v1057
          %v1460 = vadd.f32 %v1444, %v1074
          %v1461 = vadd.f32 %v1445, %v1075
          %v1462 = vadd.f32 %v1446, %v1076
          %v1463 = vadd.f32 %v1447, %v1077
          %v1464 = vadd.f32 %v1448, %v1078
          %v1465 = vadd.f32 %v1449, %v1079
          %v1466 = vadd.f32 %v1450, %v1080
          %v1467 = vadd.f32 %v1451, %v1081
          %v1468 = vadd.f32 %v1452, %v1082
          %v1469 = vadd.f32 %v1453, %v1083
          %v1470 = vadd.f32 %v1454, %v1084
          %v1471 = vadd.f32 %v1455, %v1085
          %v1472 = vadd.f32 %v1456, %v1086
          %v1473 = vadd.f32 %v1457, %v1087
          %v1474 = vadd.f32 %v1458, %v1088
          %v1475 = vadd.f32 %v1459, %v1089
          %v1476 = vround.ne.pseudo %v1460
          %v1477 = vround.ne.pseudo %v1461
          %v1478 = vround.ne.pseudo %v1462
          %v1479 = vround.ne.pseudo %v1463
          %v1480 = vround.ne.pseudo %v1464
          %v1481 = vround.ne.pseudo %v1465
          %v1482 = vround.ne.pseudo %v1466
          %v1483 = vround.ne.pseudo %v1467
          %v1484 = vround.ne.pseudo %v1468
          %v1485 = vround.ne.pseudo %v1469
          %v1486 = vround.ne.pseudo %v1470
          %v1487 = vround.ne.pseudo %v1471
          %v1488 = vround.ne.pseudo %v1472
          %v1489 = vround.ne.pseudo %v1473
          %v1490 = vround.ne.pseudo %v1474
          %v1491 = vround.ne.pseudo %v1475
          %v1492 = vmax.f32 %v1476, 0.0
          %v1493 = vmax.f32 %v1477, 0.0
          %v1494 = vmax.f32 %v1478, 0.0
          %v1495 = vmax.f32 %v1479, 0.0
          %v1496 = vmax.f32 %v1480, 0.0
          %v1497 = vmax.f32 %v1481, 0.0
          %v1498 = vmax.f32 %v1482, 0.0
          %v1499 = vmax.f32 %v1483, 0.0
          %v1500 = vmax.f32 %v1484, 0.0
          %v1501 = vmax.f32 %v1485, 0.0
          %v1502 = vmax.f32 %v1486, 0.0
          %v1503 = vmax.f32 %v1487, 0.0
          %v1504 = vmax.f32 %v1488, 0.0
          %v1505 = vmax.f32 %v1489, 0.0
          %v1506 = vmax.f32 %v1490, 0.0
          %v1507 = vmax.f32 %v1491, 0.0
          %v1508 = vmin.f32 %v1492, 255.0
          %v1509 = vmin.f32 %v1493, 255.0
          %v1510 = vmin.f32 %v1494, 255.0
          %v1511 = vmin.f32 %v1495, 255.0
          %v1512 = vmin.f32 %v1496, 255.0
          %v1513 = vmin.f32 %v1497, 255.0
          %v1514 = vmin.f32 %v1498, 255.0
          %v1515 = vmin.f32 %v1499, 255.0
          %v1516 = vmin.f32 %v1500, 255.0
          %v1517 = vmin.f32 %v1501, 255.0
          %v1518 = vmin.f32 %v1502, 255.0
          %v1519 = vmin.f32 %v1503, 255.0
          %v1520 = vmin.f32 %v1504, 255.0
          %v1521 = vmin.f32 %v1505, 255.0
          %v1522 = vmin.f32 %v1506, 255.0
          %v1523 = vmin.f32 %v1507, 255.0
          %v1524 = vsub.f32 %v1508, %v1074
          %v1525 = vsub.f32 %v1509, %v1075
          %v1526 = vsub.f32 %v1510, %v1076
          %v1527 = vsub.f32 %v1511, %v1077
          %v1528 = vsub.f32 %v1512, %v1078
          %v1529 = vsub.f32 %v1513, %v1079
          %v1530 = vsub.f32 %v1514, %v1080
          %v1531 = vsub.f32 %v1515, %v1081
          %v1532 = vsub.f32 %v1516, %v1082
          %v1533 = vsub.f32 %v1517, %v1083
          %v1534 = vsub.f32 %v1518, %v1084
          %v1535 = vsub.f32 %v1519, %v1085
          %v1536 = vsub.f32 %v1520, %v1086
          %v1537 = vsub.f32 %v1521, %v1087
          %v1538 = vsub.f32 %v1522, %v1088
          %v1539 = vsub.f32 %v1523, %v1089
          %v1540 = vmul.f32 %v1524, %v1091
          %v1541 = vmul.f32 %v1525, %v1093
          %v1542 = vmul.f32 %v1526, %v1095
          %v1543 = vmul.f32 %v1527, %v1097
          %v1544 = vmul.f32 %v1528, %v1099
          %v1545 = vmul.f32 %v1529, %v1101
          %v1546 = vmul.f32 %v1530, %v1103
          %v1547 = vmul.f32 %v1531, %v1105
          %v1548 = vmul.f32 %v1532, %v1107
          %v1549 = vmul.f32 %v1533, %v1109
          %v1550 = vmul.f32 %v1534, %v1111
          %v1551 = vmul.f32 %v1535, %v1113
          %v1552 = vmul.f32 %v1536, %v1115
          %v1553 = vmul.f32 %v1537, %v1117
          %v1554 = vmul.f32 %v1538, %v1119
          %v1555 = vmul.f32 %v1539, %v1121
          %1556 = vst [vmem:[#allocation2 + $0x8] sm:$0xff] %v1540
          %1557 = vst [vmem:[#allocation2 + $0x18] sm:$0xff] %v1541
          %1558 = vst [vmem:[#allocation2 + $0x28] sm:$0xff] %v1542
          %1559 = vst [vmem:[#allocation2 + $0x38] sm:$0xff] %v1543
          %1560 = vst [vmem:[#allocation2 + $0x48] sm:$0xff] %v1544
          %1561 = vst [vmem:[#allocation2 + $0x58] sm:$0xff] %v1545
          %1562 = vst [vmem:[#allocation2 + $0x68] sm:$0xff] %v1546
          %1563 = vst [vmem:[#allocation2 + $0x78] sm:$0xff] %v1547
          %1564 = vst [vmem:[#allocation2 + $0x88] sm:$0xff] %v1548
          %1565 = vst [vmem:[#allocation2 + $0x98] sm:$0xff] %v1549
          %1566 = vst [vmem:[#allocation2 + $0xa8] sm:$0xff] %v1550
          %1567 = vst [vmem:[#allocation2 + $0xb8] sm:$0xff] %v1551
          %1568 = vst [vmem:[#allocation2 + $0xc8] sm:$0xff] %v1552
          %1569 = vst [vmem:[#allocation2 + $0xd8] sm:$0xff] %v1553
          %1570 = vst [vmem:[#allocation2 + $0xe8] sm:$0xff] %v1554
          %1571 = vst [vmem:[#allocation2 + $0xf8] sm:$0xff] %v1555
        $region60: #{tpu_custom_call.1} parent=39 // pred_fallthru
          _
        %v1572 = vld [vmem:[%s294] sm:$0xff]
        %v1573 = vld [vmem:[%s294 + $0x8] sm:$0xff]
        %v1574 = vld [vmem:[#allocation2] sm:$0xff]
        %v1575 = vld [vmem:[#allocation2 + $0x8] sm:$0xff]
        %v1576 = vld [vmem:[#allocation2 + $0x10] sm:$0xff]
        %v1577 = vld [vmem:[#allocation2 + $0x18] sm:$0xff]
        %v1578 = vld [vmem:[#allocation2 + $0x20] sm:$0xff]
        %v1579 = vld [vmem:[#allocation2 + $0x28] sm:$0xff]
        %v1580 = vld [vmem:[#allocation2 + $0x30] sm:$0xff]
        %v1581 = vld [vmem:[#allocation2 + $0x38] sm:$0xff]
        %v1582 = vld [vmem:[#allocation2 + $0x40] sm:$0xff]
        %v1583 = vld [vmem:[#allocation2 + $0x48] sm:$0xff]
        %v1584 = vld [vmem:[#allocation2 + $0x50] sm:$0xff]
        %v1585 = vld [vmem:[#allocation2 + $0x58] sm:$0xff]
        %v1586 = vld [vmem:[#allocation2 + $0x60] sm:$0xff]
        %v1587 = vld [vmem:[#allocation2 + $0x68] sm:$0xff]
        %v1588 = vld [vmem:[#allocation2 + $0x70] sm:$0xff]
        %v1589 = vld [vmem:[#allocation2 + $0x78] sm:$0xff]
        %v1590 = vld [vmem:[#allocation2 + $0x80] sm:$0xff]
        %v1591 = vld [vmem:[#allocation2 + $0x88] sm:$0xff]
        %v1592 = vld [vmem:[#allocation2 + $0x90] sm:$0xff]
        %v1593 = vld [vmem:[#allocation2 + $0x98] sm:$0xff]
        %v1594 = vld [vmem:[#allocation2 + $0xa0] sm:$0xff]
        %v1595 = vld [vmem:[#allocation2 + $0xa8] sm:$0xff]
        %v1596 = vld [vmem:[#allocation2 + $0xb0] sm:$0xff]
        %v1597 = vld [vmem:[#allocation2 + $0xb8] sm:$0xff]
        %v1598 = vld [vmem:[#allocation2 + $0xc0] sm:$0xff]
        %v1599 = vld [vmem:[#allocation2 + $0xc8] sm:$0xff]
        %v1600 = vld [vmem:[#allocation2 + $0xd0] sm:$0xff]
        %v1601 = vld [vmem:[#allocation2 + $0xd8] sm:$0xff]
        %v1602 = vld [vmem:[#allocation2 + $0xe0] sm:$0xff]
        %v1603 = vld [vmem:[#allocation2 + $0xe8] sm:$0xff]
        %v1604 = vld [vmem:[#allocation2 + $0xf0] sm:$0xff]
        %v1605 = vld [vmem:[#allocation2 + $0xf8] sm:$0xff]
        %v1606 = vld [vmem:[%s359] sm:$0x1]
        %v1608 = vlaneseq
        %v1609 = vshrl.u32 %v1608, 7
        %v1610 = vsub.s32 0, %v1609
        %v1611 = vrot.slane %v1606, %v1610
        %1613 = vmatprep.subr.mxu0 %v1575
        %1614 = vmatpush1.xpose.msra.mxu0 %v1574
        %1615 = vmatprep.subr.mxu0 %v1577
        %1616 = vmatpush1.xpose.msra.mxu0 %v1576
        %1617 = vmatprep.subr.mxu0 %v1579
        %1618 = vmatpush1.xpose.msra.mxu0 %v1578
        %1619 = vmatprep.subr.mxu0 %v1581
        %1620 = vmatpush1.xpose.msra.mxu0 %v1580
        %1621 = vmatprep.subr.mxu0 %v1583
        %1622 = vmatpush1.xpose.msra.mxu0 %v1582
        %1623 = vmatprep.subr.mxu0 %v1585
        %1624 = vmatpush1.xpose.msra.mxu0 %v1584
        %1625 = vmatprep.subr.mxu0 %v1587
        %1626 = vmatpush1.xpose.msra.mxu0 %v1586
        %1627 = vmatprep.subr.mxu0 %v1589
        %1628 = vmatpush1.xpose.msra.mxu0 %v1588
        %1629 = vmatprep.subr.mxu0 %v1591
        %1630 = vmatpush1.xpose.msra.mxu0 %v1590
        %1631 = vmatprep.subr.mxu0 %v1593
        %1632 = vmatpush1.xpose.msra.mxu0 %v1592
        %1633 = vmatprep.subr.mxu0 %v1595
        %1634 = vmatpush1.xpose.msra.mxu0 %v1594
        %1635 = vmatprep.subr.mxu0 %v1597
        %1636 = vmatpush1.xpose.msra.mxu0 %v1596
        %1637 = vmatprep.subr.mxu0 %v1599
        %1638 = vmatpush1.xpose.msra.mxu0 %v1598
        %1639 = vmatprep.subr.mxu0 %v1601
        %1640 = vmatpush1.xpose.msra.mxu0 %v1600
        %1641 = vmatprep.subr.mxu0 %v1603
        %1642 = vmatpush1.xpose.msra.mxu0 %v1602
        %1643 = vmatprep.subr.mxu0 %v1605
        %1644 = vmatpush1.xpose.msra.mxu0 %v1604
        %1645 = vmatprep.subr.mxu0 0.0
        %1646 = vmatpush1.xpose.msra.mxu0 0.0
        %1647 = vmatprep.subr.mxu0 0.0
        %1648 = vmatpush1.xpose.msra.mxu0 0.0
        %1649 = vmatprep.subr.mxu0 0.0
        %1650 = vmatpush1.xpose.msra.mxu0 0.0
        %1651 = vmatprep.subr.mxu0 0.0
        %1652 = vmatpush1.xpose.msra.mxu0 0.0
        %1653 = vmatprep.subr.mxu0 0.0
        %1654 = vmatpush1.xpose.msra.mxu0 0.0
        %1655 = vmatprep.subr.mxu0 0.0
        %1656 = vmatpush1.xpose.msra.mxu0 0.0
        %1657 = vmatprep.subr.mxu0 0.0
        %1658 = vmatpush1.xpose.msra.mxu0 0.0
        %1659 = vmatprep.subr.mxu0 0.0
        %1660 = vmatpush1.xpose.msra.mxu0 0.0
        %1661 = vmatprep.subr.mxu0 0.0
        %1662 = vmatpush1.xpose.msra.mxu0 0.0
        %1663 = vmatprep.subr.mxu0 0.0
        %1664 = vmatpush1.xpose.msra.mxu0 0.0
        %1665 = vmatprep.subr.mxu0 0.0
        %1666 = vmatpush1.xpose.msra.mxu0 0.0
        %1667 = vmatprep.subr.mxu0 0.0
        %1668 = vmatpush1.xpose.msra.mxu0 0.0
        %1669 = vmatprep.subr.mxu0 0.0
        %1670 = vmatpush1.xpose.msra.mxu0 0.0
        %1671 = vmatprep.subr.mxu0 0.0
        %1672 = vmatpush1.xpose.msra.mxu0 0.0
        %1673 = vmatprep.subr.mxu0 0.0
        %1674 = vmatpush1.xpose.msra.mxu0 0.0
        %1675 = vmatprep.subr.mxu0 0.0
        %1676 = vmatpush1.xpose.msra.mxu0 0.0
        %1677 = vmatprep.mubr.f32.mxu0 %v1573
        %1678 = vmatmul.mubr.f32.gmra.mrb[0].mxu0 %v1572
        %v1679 = vpop.f32.mrb[0].mxu0
        %v1680 = vadd.f32 %v1611, %v1679
        %v1681 = vpop.f32.mrb[0].mxu0
        %1682 = vdwg.mxu0
        %1683 = vst [vmem:[%s355] sm:$0xff] %v1680
        %s1684 = sand.u32 %s175, 1
        %s1685 = scalar_lea.sflag [#allocation5], %s1684
        %s1686 = sand.u32 %s175, 1
        %s1687 = smul.addr %s1686, 8
        %s1688 = scalar_lea.vmem [#allocation11], %s1687
        // Predicated region
        $region61: #{tpu_custom_call.1} parent=39 // pred_check
          %p1689 = pneg %p185
        $region62: #{tpu_custom_call.1} parent=39 // pred_check_branch
          %1691 = sbr.rel (%p1689) target = $region64
        $region63: #{tpu_custom_call.1} parent=39 // pred_region
          %s1693 = ssub.s32 128, 128
          %1694 = vsyncadd %s1685, %s1693
          %s1695 = smul.addr %s33, 2
          %s1696 = sadd.s32 %s32, %s1695
          %s1697 = smul.addr %s1696, 128
          %s1698 = scalar_lea.hbm %s5, %s1697
          %s1700 = sshll.u32 %s1688, 4
          %s1701 = int_to_ptr.vmem [resolvable:$true] %s1700
          %1703 = dma.vmem_to_hbm [thread:$0]  %s1701, 128, %s1698, %s1685
        $region64: #{tpu_custom_call.1} parent=39 // pred_fallthru
          _
      $region40: #{tpu_custom_call.1} parent=5 // pred_fallthru
        _
      %p1704 = scmp.le.s32.totalorder 2, %s23
      // Predicated region
      $region65: #{tpu_custom_call.1} parent=5 // pred_check
        %p1705 = pneg %p1704
      $region66: #{tpu_custom_call.1} parent=5 // pred_check_branch
        %1707 = sbr.rel (%p1705) target = $region68
      $region67: #{tpu_custom_call.1} parent=5 // pred_region
        %s1708 = ssub.s32 %s23, 2
        // Predicated region
        $region69: #{tpu_custom_call.1} parent=67 // pred_check
          %p1709 = pneg %p191
        $region70: #{tpu_custom_call.1} parent=67 // pred_check_branch
          %1711 = sbr.rel (%p1709) target = $region72
        $region71: #{tpu_custom_call.1} parent=67 // pred_region
          %s1712 = sand.u32 %s176, 1
          %s1713 = scalar_lea.sflag [#allocation5], %s1712
          %s1714 = sand.u32 %s176, 1
          %s1715 = smul.addr %s1714, 8
          %s1716 = scalar_lea.vmem [#allocation11], %s1715
          %1717 = dma.done %s1713, 128
        $region72: #{tpu_custom_call.1} parent=67 // pred_fallthru
          _
      $region68: #{tpu_custom_call.1} parent=5 // pred_fallthru
        _
    $region6: #{tpu_custom_call.1} parent=1 // loop_footer
      %s27 = sadd.s32 1, %s23
    $region7: #{tpu_custom_call.1} parent=1 // loop_footer_branch
      %22 = sbr.rel target = $region3
    $region8: #{tpu_custom_call.1} parent=1 // loop_exit
      _
    %1718 = vsyncpa [#allocation4], 1
    %s1719 = scalar_lea.sflag [#allocation4], 1
    %1720 = vsyncpa %s1719, 1
    %1721 = vsyncpa [#allocation7], 1
    %s1722 = scalar_lea.sflag [#allocation7], 1
    %1723 = vsyncpa %s1722, 1
    %1724 = vsyncpa [#allocation10], 1
    %s1725 = scalar_lea.sflag [#allocation10], 1
    %1726 = vsyncpa %s1725, 1
    %1727 = vsyncpa [#allocation5], 1
    %s1728 = scalar_lea.sflag [#allocation5], 1
    %1729 = vsyncpa %s1728, 1

</llo_original>
